<compile_context>
chip_gen: v7x
topology: tpu7x:2x2x1
jax: 0.10.0
libtpu: 0.0.40
codegen_flags: <defaults>
</compile_context>

<pallas_src>
import functools
import math

import jax
import jax.numpy as jnp
from jax.experimental import pallas as pl
from jax.experimental.pallas import tpu as pltpu


# ----------------------------- in-kernel helpers -----------------------------

def _norm_f32(x, alpha, bias, eps=1e-6):
    # PyTorch-style Norm: alpha * (x - mean) / (std_unbiased + eps) + bias
    d = x.shape[-1]
    mean = jnp.mean(x, axis=-1, keepdims=True)
    var = jnp.sum((x - mean) ** 2, axis=-1, keepdims=True) * (1.0 / (d - 1))
    inv = pl.reciprocal(jnp.sqrt(var) + eps, approx=True)   # EUP, multiply not divide
    return alpha * (x - mean) * inv + bias


# ----------------------------- fused Pallas kernel ----------------------------

def encoder_stack_kernel(x_ref,
                         n1a_ref, n1b_ref,
                         wqkv_ref, bqkv_ref,
                         wo_ref, bo_ref,
                         n2a_ref, n2b_ref,
                         w1_ref, b1_ref, w2_ref, b2_ref,
                         fa_ref, fb_ref,
                         o_ref, h_ref, *, num_heads):
    l = pl.program_id(1)
    num_layers = pl.num_programs(1)

    bt, S, D = x_ref.shape            # batch chunk resident in this grid step
    H = num_heads
    dk = D // H

    # Load the input activations once per batch chunk (layer axis is innermost).
    @pl.when(l == 0)
    def _():
        for b in range(bt):
            h_ref[b * S:(b + 1) * S, :] = x_ref[b].astype(jnp.float32)

    x = h_ref[...]                    # (Bt*S, D) f32, resident across layers

    # --- pre-norm + fused QKV projection: one (Bt*S, D)@(D, 3D) bf16 MXU matmul ---
    # (1/sqrt(dk) is already folded into the Q columns / bq on the host.)
    x2 = _norm_f32(x, n1a_ref[...], n1b_ref[...])
    qkv = jnp.dot(x2.astype(jnp.bfloat16), wqkv_ref[...],
                  preferred_element_type=jnp.float32) + bqkv_ref[...]

    # --- gather per-(head, batch) tiles onto one leading batch axis: (H*Bt, S, dk) ---
    def gather_heads(offset):
        pieces = [qkv[b * S:(b + 1) * S, offset + h * dk: offset + (h + 1) * dk]
                  for h in range(H) for b in range(bt)]        # n = h*bt + b
        return jnp.stack(pieces, axis=0).astype(jnp.bfloat16)

    qh = gather_heads(0)
    kh = gather_heads(D)
    vh = gather_heads(2 * D)

    # --- attention, batched over (head, batch); softmax in f32 ---
    s = jnp.einsum('nqd,nkd->nqk', qh, kh, preferred_element_type=jnp.float32)
    m = jnp.max(s, axis=-1, keepdims=True)
    e = jnp.exp(s - m)
    p = e * pl.reciprocal(jnp.sum(e, axis=-1, keepdims=True), approx=True)
    ctx = jnp.einsum('nqk,nkd->nqd', p.astype(jnp.bfloat16), vh,
                     preferred_element_type=jnp.float32)       # (H*Bt, S, dk)

    # --- concat heads back into lanes and do ONE (Bt*S, D)@(D, D) output projection ---
    rows = [jnp.concatenate([ctx[h * bt + b] for h in range(H)], axis=-1)   # (S, D)
            for b in range(bt)]
    ctx_cat = jnp.concatenate(rows, axis=0)                    # (Bt*S, D)
    attn = jnp.dot(ctx_cat.astype(jnp.bfloat16), wo_ref[...],
                   preferred_element_type=jnp.float32) + bo_ref[...]
    x = x + attn

    # --- pre-norm + feed-forward (ReLU) + residual, bf16 MXU matmuls ---
    x2 = _norm_f32(x, n2a_ref[...], n2b_ref[...])
    h1 = jnp.dot(x2.astype(jnp.bfloat16), w1_ref[...],
                 preferred_element_type=jnp.float32) + b1_ref[...]
    h1 = jnp.maximum(h1, 0.0)
    ff = jnp.dot(h1.astype(jnp.bfloat16), w2_ref[...],
                 preferred_element_type=jnp.float32) + b2_ref[...]
    x = x + ff

    h_ref[...] = x                    # carry to next layer

    # --- fused final Norm, written only on the last layer step ---
    @pl.when(l == num_layers - 1)
    def _():
        out = _norm_f32(x, fa_ref[...], fb_ref[...]).astype(o_ref.dtype)
        for b in range(bt):
            o_ref[b] = out[b * S:(b + 1) * S, :]


# ----------------------------- wrapper ----------------------------------------

def encoder_forward(x, layer_params, final_params, num_heads, batch_chunk=None):
    B, S, D = x.shape
    L = len(layer_params)
    assert D % num_heads == 0, "model dim must be divisible by num_heads"
    dk = D // num_heads
    inv_sqrt_dk = 1.0 / math.sqrt(dk)

    if batch_chunk is None:
        batch_chunk = next(c for c in (4, 2, 1) if B % c == 0)
    bt = batch_chunk
    assert B % bt == 0

    f32, bf16 = jnp.float32, jnp.bfloat16

    def stack(name, dtype=f32):
        return jnp.stack([p[name] for p in layer_params], axis=0).astype(dtype)

    # Fused QKV with the softmax scale folded into the Q columns; streamed in bf16.
    wqkv = jnp.stack(
        [jnp.concatenate([p["wq"] * inv_sqrt_dk, p["wk"], p["wv"]], axis=1)
         for p in layer_params], axis=0).astype(bf16)                  # (L, D, 3D)
    bqkv = jnp.stack(
        [jnp.concatenate([p["bq"] * inv_sqrt_dk, p["bk"], p["bv"]], axis=1)
         for p in layer_params], axis=0).astype(f32)                   # (L, 1, 3D)

    weights = [stack("n1a"), stack("n1b"),
               wqkv, bqkv,
               stack("wo", bf16), stack("bo"),
               stack("n2a"), stack("n2b"),
               stack("w1", bf16), stack("b1"), stack("w2", bf16), stack("b2")]
    finals = [final_params["alpha"].astype(f32), final_params["bias"].astype(f32)]

    def layer_spec(arr):
        block = (None,) + arr.shape[1:]
        tail = len(arr.shape) - 1
        return pl.BlockSpec(block, lambda bc, l, _t=tail: (l,) + (0,) * _t)

    def const_spec(arr):
        nd = len(arr.shape)
        return pl.BlockSpec(arr.shape, lambda bc, l, _n=nd: (0,) * _n)

    in_specs = ([pl.BlockSpec((bt, S, D), lambda bc, l: (bc, 0, 0))]
                + [layer_spec(w) for w in weights]
                + [const_spec(f) for f in finals])

    grid = (B // bt, L)                      # batch chunks parallel, layers serial

    # Advisory cost estimate for the XLA scheduler.
    DFF = layer_params[0]["w1"].shape[1]
    flops = B * L * (2 * S * D * 3 * D + 4 * S * S * D + 2 * S * D * D
                     + 4 * S * D * DFF)
    transcendentals = B * L * num_heads * S * S
    weight_bytes = (sum(int(w.size) * w.dtype.itemsize for w in weights)
                    + sum(int(f.size) * f.dtype.itemsize for f in finals))
    bytes_accessed = 2 * B * S * D * x.dtype.itemsize + weight_bytes * (B // bt)

    grid_spec = pltpu.PrefetchScalarGridSpec(
        num_scalar_prefetch=0,
        grid=grid,
        in_specs=in_specs,
        out_specs=pl.BlockSpec((bt, S, D), lambda bc, l: (bc, 0, 0)),
        scratch_shapes=[pltpu.VMEM((bt * S, D), jnp.float32)],
    )

    return pl.pallas_call(
        functools.partial(encoder_stack_kernel, num_heads=num_heads),
        out_shape=jax.ShapeDtypeStruct((B, S, D), x.dtype),
        grid_spec=grid_spec,
        compiler_params=pltpu.CompilerParams(
            dimension_semantics=("parallel", "arbitrary"),
            vmem_limit_bytes=64 * 1024 * 1024),
        cost_estimate=pl.CostEstimate(flops=flops,
                                      transcendentals=transcendentals,
                                      bytes_accessed=bytes_accessed),
    )(x, *weights, *finals)


# ----------------------------- pure-JAX reference ------------------------------

def _ref_norm(x, alpha, bias, eps=1e-6):
    d = x.shape[-1]
    mean = jnp.mean(x, axis=-1, keepdims=True)
    var = jnp.sum((x - mean) ** 2, axis=-1, keepdims=True) / (d - 1)
    return alpha * (x - mean) / (jnp.sqrt(var) + eps) + bias


def _ref_layer(x, p, num_heads):
    B, S, D = x.shape
    dk = D // num_heads
    x2 = _ref_norm(x, p["n1a"], p["n1b"])
    q = x2 @ p["wq"] + p["bq"]
    k = x2 @ p["wk"] + p["bk"]
    v = x2 @ p["wv"] + p["bv"]
    qh = q.reshape(B, S, num_heads, dk).transpose(0, 2, 1, 3)
    kh = k.reshape(B, S, num_heads, dk).transpose(0, 2, 1, 3)
    vh = v.reshape(B, S, num_heads, dk).transpose(0, 2, 1, 3)
    s = jnp.einsum("bhqd,bhkd->bhqk", qh, kh) / math.sqrt(dk)
    a = jax.nn.softmax(s, axis=-1)
    o = jnp.einsum("bhqk,bhkd->bhqd", a, vh).transpose(0, 2, 1, 3).reshape(B, S, D)
    x = x + (o @ p["wo"] + p["bo"])
    x2 = _ref_norm(x, p["n2a"], p["n2b"])
    ff = jnp.maximum(x2 @ p["w1"] + p["b1"], 0.0) @ p["w2"] + p["b2"]
    return x + ff


def _ref_forward(x, layer_params, final_params, num_heads):
    out = x
    for p in layer_params:
        out = _ref_layer(out, p, num_heads)
    return _ref_norm(out, final_params["alpha"], final_params["bias"])


# ----------------------------- main --------------------------------------------

if __name__ == "__main__":
    B, S, D, H, DFF, L = 2, 8, 32, 4, 64, 2

    key = jax.random.PRNGKey(0)
    key, xk = jax.random.split(key)
    x = jax.random.normal(xk, (B, S, D), dtype=jnp.float32)

    def mk(key, shape, scale=0.05):
        return (scale * jax.random.normal(key, shape)).astype(jnp.float32)

    layer_params = []
    for _ in range(L):
        keys = jax.random.split(key, 11)
        key = keys[0]
        p = {
            "n1a": 1.0 + mk(keys[7], (1, D), 0.1), "n1b": mk(keys[8], (1, D), 0.1),
            "wq": mk(keys[1], (D, D)), "bq": mk(keys[9], (1, D), 0.02),
            "wk": mk(keys[2], (D, D)), "bk": jnp.zeros((1, D), jnp.float32),
            "wv": mk(keys[3], (D, D)), "bv": jnp.zeros((1, D), jnp.float32),
            "wo": mk(keys[4], (D, D)), "bo": jnp.zeros((1, D), jnp.float32),
            "n2a": 1.0 + mk(keys[10], (1, D), 0.1), "n2b": jnp.zeros((1, D), jnp.float32),
            "w1": mk(keys[5], (D, DFF)), "b1": jnp.zeros((1, DFF), jnp.float32),
            "w2": mk(keys[6], (DFF, D)), "b2": jnp.zeros((1, D), jnp.float32),
        }
        layer_params.append(p)

    final_params = {"alpha": jnp.ones((1, D), jnp.float32),
                    "bias": jnp.zeros((1, D), jnp.float32)}

    out = encoder_forward(x, layer_params, final_params, H)
    out = jax.block_until_ready(out)

    ref = _ref_forward(x, layer_params, final_params, H)
    assert out.shape == (B, S, D) and out.dtype == jnp.float32
    # Tolerance relaxed vs. the f32 reference because MXU operands/weights are bf16
    # and reciprocals use the approximate EUP path (per the performance review).
    assert jnp.allclose(out, ref, atol=3e-2, rtol=3e-2), "mismatch vs JAX reference"

    # TODO(synk): dropout inside the torch encoder layers is identity in eval mode and
    # is not represented; no attention/padding mask exists in the reference forward.
    print("KERNEL_OK")
</pallas_src>

<mosaic_0001>
module attributes {stable_mosaic.version = 11 : i64} {
  func.func @encoder_stack_kernel(%arg0: i32, %arg1: i32, %arg2: memref<2x8x32xf32, #tpu.memory_space<vmem>>, %arg3: memref<1x1x32xf32, #tpu.memory_space<vmem>>, %arg4: memref<1x1x32xf32, #tpu.memory_space<vmem>>, %arg5: memref<1x32x96xbf16, #tpu.memory_space<vmem>>, %arg6: memref<1x1x96xf32, #tpu.memory_space<vmem>>, %arg7: memref<1x32x32xbf16, #tpu.memory_space<vmem>>, %arg8: memref<1x1x32xf32, #tpu.memory_space<vmem>>, %arg9: memref<1x1x32xf32, #tpu.memory_space<vmem>>, %arg10: memref<1x1x32xf32, #tpu.memory_space<vmem>>, %arg11: memref<1x32x64xbf16, #tpu.memory_space<vmem>>, %arg12: memref<1x1x64xf32, #tpu.memory_space<vmem>>, %arg13: memref<1x64x32xbf16, #tpu.memory_space<vmem>>, %arg14: memref<1x1x32xf32, #tpu.memory_space<vmem>>, %arg15: memref<1x32xf32, #tpu.memory_space<vmem>>, %arg16: memref<1x32xf32, #tpu.memory_space<vmem>>, %arg17: memref<2x8x32xf32, #tpu.memory_space<vmem>>, %arg18: memref<16x32xf32, #tpu.memory_space<vmem>>) attributes {dimension_semantics = [#tpu.dimension_semantics<parallel>, #tpu.dimension_semantics<arbitrary>], iteration_bounds = array<i64: 1, 2>, scalar_prefetch = 0 : i64, scratch_operands = 1 : i64, tpu.core_type = #tpu.core_type<tc>, window_params = [{transform_indices = @transform_0, window_bounds = array<i64: 2, 8, 32>}, {transform_indices = @transform_1, window_bounds = array<i64: 1, 1, 32>}, {transform_indices = @transform_2, window_bounds = array<i64: 1, 1, 32>}, {transform_indices = @transform_3, window_bounds = array<i64: 1, 32, 96>}, {transform_indices = @transform_4, window_bounds = array<i64: 1, 1, 96>}, {transform_indices = @transform_5, window_bounds = array<i64: 1, 32, 32>}, {transform_indices = @transform_6, window_bounds = array<i64: 1, 1, 32>}, {transform_indices = @transform_7, window_bounds = array<i64: 1, 1, 32>}, {transform_indices = @transform_8, window_bounds = array<i64: 1, 1, 32>}, {transform_indices = @transform_9, window_bounds = array<i64: 1, 32, 64>}, {transform_indices = @transform_10, window_bounds = array<i64: 1, 1, 64>}, {transform_indices = @transform_11, window_bounds = array<i64: 1, 64, 32>}, {transform_indices = @transform_12, window_bounds = array<i64: 1, 1, 32>}, {pipeline_mode = #tpu.pipeline_mode<synchronous>, transform_indices = @transform_13, window_bounds = array<i64: 1, 32>}, {pipeline_mode = #tpu.pipeline_mode<synchronous>, transform_indices = @transform_14, window_bounds = array<i64: 1, 32>}, {transform_indices = @transform_15, window_bounds = array<i64: 2, 8, 32>}]} {
    %c0_i32 = arith.constant 0 : i32
    %0 = arith.cmpi eq, %arg1, %c0_i32 : i32
    %1 = arith.extui %0 : i1 to i32
    %c0_i32_0 = arith.constant 0 : i32
    %2 = arith.cmpi ne, %1, %c0_i32_0 : i32
    scf.if %2 {
      %c0_59 = arith.constant 0 : index
      %c0_60 = arith.constant 0 : index
      %c0_61 = arith.constant 0 : index
      %184 = vector.load %arg2[%c0_59, %c0_60, %c0_61] : memref<2x8x32xf32, #tpu.memory_space<vmem>>, vector<1x8x32xf32>
      %185 = vector.shape_cast %184 : vector<1x8x32xf32> to vector<8x32xf32>
      %c0_62 = arith.constant 0 : index
      %c0_63 = arith.constant 0 : index
      %186 = vector.load %arg18[%c0_62, %c0_63] : memref<16x32xf32, #tpu.memory_space<vmem>>, vector<8x32xf32>
      tpu.vector_store %arg18[%c0_62, %c0_63], %185 {strides = array<i32>} : memref<16x32xf32, #tpu.memory_space<vmem>>, vector<8x32xf32>,
      %c1 = arith.constant 1 : index
      %c0_64 = arith.constant 0 : index
      %c0_65 = arith.constant 0 : index
      %187 = vector.load %arg2[%c1, %c0_64, %c0_65] : memref<2x8x32xf32, #tpu.memory_space<vmem>>, vector<1x8x32xf32>
      %188 = vector.shape_cast %187 : vector<1x8x32xf32> to vector<8x32xf32>
      %c8 = arith.constant 8 : index
      %c0_66 = arith.constant 0 : index
      %189 = vector.load %arg18[%c8, %c0_66] : memref<16x32xf32, #tpu.memory_space<vmem>>, vector<8x32xf32>
      tpu.vector_store %arg18[%c8, %c0_66], %188 {strides = array<i32>} : memref<16x32xf32, #tpu.memory_space<vmem>>, vector<8x32xf32>,
    } else {
    }
    %c0 = arith.constant 0 : index
    %c0_1 = arith.constant 0 : index
    %3 = vector.load %arg18[%c0, %c0_1] : memref<16x32xf32, #tpu.memory_space<vmem>>, vector<16x32xf32>
    %c0_2 = arith.constant 0 : index
    %c0_3 = arith.constant 0 : index
    %c0_4 = arith.constant 0 : index
    %4 = vector.load %arg3[%c0_2, %c0_3, %c0_4] : memref<1x1x32xf32, #tpu.memory_space<vmem>>, vector<1x1x32xf32>
    %5 = vector.shape_cast %4 : vector<1x1x32xf32> to vector<1x32xf32>
    %c0_5 = arith.constant 0 : index
    %c0_6 = arith.constant 0 : index
    %c0_7 = arith.constant 0 : index
    %6 = vector.load %arg4[%c0_5, %c0_6, %c0_7] : memref<1x1x32xf32, #tpu.memory_space<vmem>>, vector<1x1x32xf32>
    %7 = vector.shape_cast %6 : vector<1x1x32xf32> to vector<1x32xf32>
    %cst = arith.constant dense<0.000000e+00> : vector<16xf32>
    %8 = vector.multi_reduction <add>, %3, %cst [1] : vector<16x32xf32> to vector<16xf32>
    %9 = vector.shape_cast %8 : vector<16xf32> to vector<16x1xf32>
    %cst_8 = arith.constant 3.200000e+01 : f32
    %10 = vector.broadcast %cst_8 : f32 to vector<16x1xf32>
    %11 = arith.divf %9, %10 : vector<16x1xf32>
    %12 = vector.broadcast %11 : vector<16x1xf32> to vector<16x32xf32>
    %13 = arith.subf %3, %12 : vector<16x32xf32>
    %14 = arith.mulf %13, %13 : vector<16x32xf32>
    %cst_9 = arith.constant dense<0.000000e+00> : vector<16xf32>
    %15 = vector.multi_reduction <add>, %14, %cst_9 [1] : vector<16x32xf32> to vector<16xf32>
    %16 = vector.shape_cast %15 : vector<16xf32> to vector<16x1xf32>
    %cst_10 = arith.constant 0.0322580636 : f32
    %17 = vector.broadcast %cst_10 : f32 to vector<16x1xf32>
    %18 = arith.mulf %16, %17 : vector<16x1xf32>
    %19 = math.sqrt %18 : vector<16x1xf32>
    %cst_11 = arith.constant 9.99999997E-7 : f32
    %20 = vector.broadcast %cst_11 : f32 to vector<16x1xf32>
    %21 = arith.addf %19, %20 : vector<16x1xf32>
    %22 = tpu.reciprocal %21 {approx = true} : vector<16x1xf32> -> vector<16x1xf32>
    %23 = vector.broadcast %11 : vector<16x1xf32> to vector<16x32xf32>
    %24 = arith.subf %3, %23 : vector<16x32xf32>
    %25 = vector.broadcast %5 : vector<1x32xf32> to vector<16x32xf32>
    %26 = arith.mulf %25, %24 : vector<16x32xf32>
    %27 = vector.broadcast %22 : vector<16x1xf32> to vector<16x32xf32>
    %28 = arith.mulf %26, %27 : vector<16x32xf32>
    %29 = vector.broadcast %7 : vector<1x32xf32> to vector<16x32xf32>
    %30 = arith.addf %28, %29 : vector<16x32xf32>
    %31 = arith.truncf %30 : vector<16x32xf32> to vector<16x32xbf16>
    %c0_12 = arith.constant 0 : index
    %c0_13 = arith.constant 0 : index
    %c0_14 = arith.constant 0 : index
    %32 = vector.load %arg5[%c0_12, %c0_13, %c0_14] : memref<1x32x96xbf16, #tpu.memory_space<vmem>>, vector<1x32x96xbf16>
    %33 = vector.shape_cast %32 : vector<1x32x96xbf16> to vector<32x96xbf16>
    %cst_15 = arith.constant dense<0.000000e+00> : vector<16x96xf32>
    %34 = tpu.matmul %31, %33, %cst_15 {dimension_numbers = #tpu.dot_dimension_numbers<[1], [0], [0], [1], [0, 0, 1, 1], [], []>} : vector<16x32xbf16>, vector<32x96xbf16>, vector<16x96xf32> -> vector<16x96xf32>
    %c0_16 = arith.constant 0 : index
    %c0_17 = arith.constant 0 : index
    %c0_18 = arith.constant 0 : index
    %35 = vector.load %arg6[%c0_16, %c0_17, %c0_18] : memref<1x1x96xf32, #tpu.memory_space<vmem>>, vector<1x1x96xf32>
    %36 = vector.shape_cast %35 : vector<1x1x96xf32> to vector<1x96xf32>
    %37 = vector.broadcast %36 : vector<1x96xf32> to vector<16x96xf32>
    %38 = arith.addf %34, %37 : vector<16x96xf32>
    %39 = vector.extract_strided_slice %38 {offsets = [0, 0], sizes = [8, 8], strides = [1, 1]} : vector<16x96xf32> to vector<8x8xf32>
    %40 = vector.extract_strided_slice %38 {offsets = [8, 0], sizes = [8, 8], strides = [1, 1]} : vector<16x96xf32> to vector<8x8xf32>
    %41 = vector.extract_strided_slice %38 {offsets = [0, 8], sizes = [8, 8], strides = [1, 1]} : vector<16x96xf32> to vector<8x8xf32>
    %42 = vector.extract_strided_slice %38 {offsets = [8, 8], sizes = [8, 8], strides = [1, 1]} : vector<16x96xf32> to vector<8x8xf32>
    %43 = vector.extract_strided_slice %38 {offsets = [0, 16], sizes = [8, 8], strides = [1, 1]} : vector<16x96xf32> to vector<8x8xf32>
    %44 = vector.extract_strided_slice %38 {offsets = [8, 16], sizes = [8, 8], strides = [1, 1]} : vector<16x96xf32> to vector<8x8xf32>
    %45 = vector.extract_strided_slice %38 {offsets = [0, 24], sizes = [8, 8], strides = [1, 1]} : vector<16x96xf32> to vector<8x8xf32>
    %46 = vector.extract_strided_slice %38 {offsets = [8, 24], sizes = [8, 8], strides = [1, 1]} : vector<16x96xf32> to vector<8x8xf32>
    %47 = vector.shape_cast %39 : vector<8x8xf32> to vector<1x8x8xf32>
    %48 = vector.shape_cast %40 : vector<8x8xf32> to vector<1x8x8xf32>
    %49 = vector.shape_cast %41 : vector<8x8xf32> to vector<1x8x8xf32>
    %50 = vector.shape_cast %42 : vector<8x8xf32> to vector<1x8x8xf32>
    %51 = vector.shape_cast %43 : vector<8x8xf32> to vector<1x8x8xf32>
    %52 = vector.shape_cast %44 : vector<8x8xf32> to vector<1x8x8xf32>
    %53 = vector.shape_cast %45 : vector<8x8xf32> to vector<1x8x8xf32>
    %54 = vector.shape_cast %46 : vector<8x8xf32> to vector<1x8x8xf32>
    %55 = tpu.concatenate %47, %48, %49, %50, %51, %52, %53, %54 in 0 : vector<1x8x8xf32>, vector<1x8x8xf32>, vector<1x8x8xf32>, vector<1x8x8xf32>, vector<1x8x8xf32>, vector<1x8x8xf32>, vector<1x8x8xf32>, vector<1x8x8xf32> -> vector<8x8x8xf32>
    %56 = arith.truncf %55 : vector<8x8x8xf32> to vector<8x8x8xbf16>
    %57 = vector.extract_strided_slice %38 {offsets = [0, 32], sizes = [8, 8], strides = [1, 1]} : vector<16x96xf32> to vector<8x8xf32>
    %58 = vector.extract_strided_slice %38 {offsets = [8, 32], sizes = [8, 8], strides = [1, 1]} : vector<16x96xf32> to vector<8x8xf32>
    %59 = vector.extract_strided_slice %38 {offsets = [0, 40], sizes = [8, 8], strides = [1, 1]} : vector<16x96xf32> to vector<8x8xf32>
    %60 = vector.extract_strided_slice %38 {offsets = [8, 40], sizes = [8, 8], strides = [1, 1]} : vector<16x96xf32> to vector<8x8xf32>
    %61 = vector.extract_strided_slice %38 {offsets = [0, 48], sizes = [8, 8], strides = [1, 1]} : vector<16x96xf32> to vector<8x8xf32>
    %62 = vector.extract_strided_slice %38 {offsets = [8, 48], sizes = [8, 8], strides = [1, 1]} : vector<16x96xf32> to vector<8x8xf32>
    %63 = vector.extract_strided_slice %38 {offsets = [0, 56], sizes = [8, 8], strides = [1, 1]} : vector<16x96xf32> to vector<8x8xf32>
    %64 = vector.extract_strided_slice %38 {offsets = [8, 56], sizes = [8, 8], strides = [1, 1]} : vector<16x96xf32> to vector<8x8xf32>
    %65 = vector.shape_cast %57 : vector<8x8xf32> to vector<1x8x8xf32>
    %66 = vector.shape_cast %58 : vector<8x8xf32> to vector<1x8x8xf32>
    %67 = vector.shape_cast %59 : vector<8x8xf32> to vector<1x8x8xf32>
    %68 = vector.shape_cast %60 : vector<8x8xf32> to vector<1x8x8xf32>
    %69 = vector.shape_cast %61 : vector<8x8xf32> to vector<1x8x8xf32>
    %70 = vector.shape_cast %62 : vector<8x8xf32> to vector<1x8x8xf32>
    %71 = vector.shape_cast %63 : vector<8x8xf32> to vector<1x8x8xf32>
    %72 = vector.shape_cast %64 : vector<8x8xf32> to vector<1x8x8xf32>
    %73 = tpu.concatenate %65, %66, %67, %68, %69, %70, %71, %72 in 0 : vector<1x8x8xf32>, vector<1x8x8xf32>, vector<1x8x8xf32>, vector<1x8x8xf32>, vector<1x8x8xf32>, vector<1x8x8xf32>, vector<1x8x8xf32>, vector<1x8x8xf32> -> vector<8x8x8xf32>
    %74 = arith.truncf %73 : vector<8x8x8xf32> to vector<8x8x8xbf16>
    %75 = vector.extract_strided_slice %38 {offsets = [0, 64], sizes = [8, 8], strides = [1, 1]} : vector<16x96xf32> to vector<8x8xf32>
    %76 = vector.extract_strided_slice %38 {offsets = [8, 64], sizes = [8, 8], strides = [1, 1]} : vector<16x96xf32> to vector<8x8xf32>
    %77 = vector.extract_strided_slice %38 {offsets = [0, 72], sizes = [8, 8], strides = [1, 1]} : vector<16x96xf32> to vector<8x8xf32>
    %78 = vector.extract_strided_slice %38 {offsets = [8, 72], sizes = [8, 8], strides = [1, 1]} : vector<16x96xf32> to vector<8x8xf32>
    %79 = vector.extract_strided_slice %38 {offsets = [0, 80], sizes = [8, 8], strides = [1, 1]} : vector<16x96xf32> to vector<8x8xf32>
    %80 = vector.extract_strided_slice %38 {offsets = [8, 80], sizes = [8, 8], strides = [1, 1]} : vector<16x96xf32> to vector<8x8xf32>
    %81 = vector.extract_strided_slice %38 {offsets = [0, 88], sizes = [8, 8], strides = [1, 1]} : vector<16x96xf32> to vector<8x8xf32>
    %82 = vector.extract_strided_slice %38 {offsets = [8, 88], sizes = [8, 8], strides = [1, 1]} : vector<16x96xf32> to vector<8x8xf32>
    %83 = vector.shape_cast %75 : vector<8x8xf32> to vector<1x8x8xf32>
    %84 = vector.shape_cast %76 : vector<8x8xf32> to vector<1x8x8xf32>
    %85 = vector.shape_cast %77 : vector<8x8xf32> to vector<1x8x8xf32>
    %86 = vector.shape_cast %78 : vector<8x8xf32> to vector<1x8x8xf32>
    %87 = vector.shape_cast %79 : vector<8x8xf32> to vector<1x8x8xf32>
    %88 = vector.shape_cast %80 : vector<8x8xf32> to vector<1x8x8xf32>
    %89 = vector.shape_cast %81 : vector<8x8xf32> to vector<1x8x8xf32>
    %90 = vector.shape_cast %82 : vector<8x8xf32> to vector<1x8x8xf32>
    %91 = tpu.concatenate %83, %84, %85, %86, %87, %88, %89, %90 in 0 : vector<1x8x8xf32>, vector<1x8x8xf32>, vector<1x8x8xf32>, vector<1x8x8xf32>, vector<1x8x8xf32>, vector<1x8x8xf32>, vector<1x8x8xf32>, vector<1x8x8xf32> -> vector<8x8x8xf32>
    %92 = arith.truncf %91 : vector<8x8x8xf32> to vector<8x8x8xbf16>
    "tpu.trace_start"() <{level = 10 : i32, message = "nqd,nkd->nqk"}> : () -> ()
    %cst_19 = arith.constant dense<0.000000e+00> : vector<8x8x8xf32>
    %93 = tpu.matmul %56, %74, %cst_19 {dimension_numbers = #tpu.dot_dimension_numbers<[2], [2], [1], [1], [0, 0, 0, 1, 1, 1], [0], [0]>} : vector<8x8x8xbf16>, vector<8x8x8xbf16>, vector<8x8x8xf32> -> vector<8x8x8xf32>
    "tpu.trace_stop"() : () -> ()
    %cst_20 = arith.constant dense<0xFF800000> : vector<8x8xf32>
    %94 = vector.multi_reduction <maximumf>, %93, %cst_20 [2] : vector<8x8x8xf32> to vector<8x8xf32>
    %95 = vector.shape_cast %94 : vector<8x8xf32> to vector<8x8x1xf32>
    %96 = vector.broadcast %95 : vector<8x8x1xf32> to vector<8x8x8xf32>
    %97 = arith.subf %93, %96 : vector<8x8x8xf32>
    %98 = math.exp %97 : vector<8x8x8xf32>
    %cst_21 = arith.constant dense<0.000000e+00> : vector<8x8xf32>
    %99 = vector.multi_reduction <add>, %98, %cst_21 [2] : vector<8x8x8xf32> to vector<8x8xf32>
    %100 = vector.shape_cast %99 : vector<8x8xf32> to vector<8x8x1xf32>
    %101 = tpu.reciprocal %100 {approx = true} : vector<8x8x1xf32> -> vector<8x8x1xf32>
    %102 = vector.broadcast %101 : vector<8x8x1xf32> to vector<8x8x8xf32>
    %103 = arith.mulf %98, %102 : vector<8x8x8xf32>
    %104 = arith.truncf %103 : vector<8x8x8xf32> to vector<8x8x8xbf16>
    "tpu.trace_start"() <{level = 10 : i32, message = "nqk,nkd->nqd"}> : () -> ()
    %cst_22 = arith.constant dense<0.000000e+00> : vector<8x8x8xf32>
    %105 = tpu.matmul %104, %92, %cst_22 {dimension_numbers = #tpu.dot_dimension_numbers<[2], [1], [1], [2], [0, 0, 0, 1, 1, 2], [0], [0]>} : vector<8x8x8xbf16>, vector<8x8x8xbf16>, vector<8x8x8xf32> -> vector<8x8x8xf32>
    "tpu.trace_stop"() : () -> ()
    %106 = vector.extract_strided_slice %105 {offsets = [0, 0, 0], sizes = [1, 8, 8], strides = [1, 1, 1]} : vector<8x8x8xf32> to vector<1x8x8xf32>
    %107 = vector.shape_cast %106 : vector<1x8x8xf32> to vector<8x8xf32>
    %108 = vector.extract_strided_slice %105 {offsets = [2, 0, 0], sizes = [1, 8, 8], strides = [1, 1, 1]} : vector<8x8x8xf32> to vector<1x8x8xf32>
    %109 = vector.shape_cast %108 : vector<1x8x8xf32> to vector<8x8xf32>
    %110 = vector.extract_strided_slice %105 {offsets = [4, 0, 0], sizes = [1, 8, 8], strides = [1, 1, 1]} : vector<8x8x8xf32> to vector<1x8x8xf32>
    %111 = vector.shape_cast %110 : vector<1x8x8xf32> to vector<8x8xf32>
    %112 = vector.extract_strided_slice %105 {offsets = [6, 0, 0], sizes = [1, 8, 8], strides = [1, 1, 1]} : vector<8x8x8xf32> to vector<1x8x8xf32>
    %113 = vector.shape_cast %112 : vector<1x8x8xf32> to vector<8x8xf32>
    %114 = tpu.concatenate %107, %109, %111, %113 in 1 : vector<8x8xf32>, vector<8x8xf32>, vector<8x8xf32>, vector<8x8xf32> -> vector<8x32xf32>
    %115 = vector.extract_strided_slice %105 {offsets = [1, 0, 0], sizes = [1, 8, 8], strides = [1, 1, 1]} : vector<8x8x8xf32> to vector<1x8x8xf32>
    %116 = vector.shape_cast %115 : vector<1x8x8xf32> to vector<8x8xf32>
    %117 = vector.extract_strided_slice %105 {offsets = [3, 0, 0], sizes = [1, 8, 8], strides = [1, 1, 1]} : vector<8x8x8xf32> to vector<1x8x8xf32>
    %118 = vector.shape_cast %117 : vector<1x8x8xf32> to vector<8x8xf32>
    %119 = vector.extract_strided_slice %105 {offsets = [5, 0, 0], sizes = [1, 8, 8], strides = [1, 1, 1]} : vector<8x8x8xf32> to vector<1x8x8xf32>
    %120 = vector.shape_cast %119 : vector<1x8x8xf32> to vector<8x8xf32>
    %121 = vector.extract_strided_slice %105 {offsets = [7, 0, 0], sizes = [1, 8, 8], strides = [1, 1, 1]} : vector<8x8x8xf32> to vector<1x8x8xf32>
    %122 = vector.shape_cast %121 : vector<1x8x8xf32> to vector<8x8xf32>
    %123 = tpu.concatenate %116, %118, %120, %122 in 1 : vector<8x8xf32>, vector<8x8xf32>, vector<8x8xf32>, vector<8x8xf32> -> vector<8x32xf32>
    %124 = tpu.concatenate %114, %123 in 0 : vector<8x32xf32>, vector<8x32xf32> -> vector<16x32xf32>
    %125 = arith.truncf %124 : vector<16x32xf32> to vector<16x32xbf16>
    %c0_23 = arith.constant 0 : index
    %c0_24 = arith.constant 0 : index
    %c0_25 = arith.constant 0 : index
    %126 = vector.load %arg7[%c0_23, %c0_24, %c0_25] : memref<1x32x32xbf16, #tpu.memory_space<vmem>>, vector<1x32x32xbf16>
    %127 = vector.shape_cast %126 : vector<1x32x32xbf16> to vector<32x32xbf16>
    %cst_26 = arith.constant dense<0.000000e+00> : vector<16x32xf32>
    %128 = tpu.matmul %125, %127, %cst_26 {dimension_numbers = #tpu.dot_dimension_numbers<[1], [0], [0], [1], [0, 0, 1, 1], [], []>} : vector<16x32xbf16>, vector<32x32xbf16>, vector<16x32xf32> -> vector<16x32xf32>
    %c0_27 = arith.constant 0 : index
    %c0_28 = arith.constant 0 : index
    %c0_29 = arith.constant 0 : index
    %129 = vector.load %arg8[%c0_27, %c0_28, %c0_29] : memref<1x1x32xf32, #tpu.memory_space<vmem>>, vector<1x1x32xf32>
    %130 = vector.shape_cast %129 : vector<1x1x32xf32> to vector<1x32xf32>
    %131 = vector.broadcast %130 : vector<1x32xf32> to vector<16x32xf32>
    %132 = arith.addf %128, %131 : vector<16x32xf32>
    %133 = arith.addf %3, %132 : vector<16x32xf32>
    %c0_30 = arith.constant 0 : index
    %c0_31 = arith.constant 0 : index
    %c0_32 = arith.constant 0 : index
    %134 = vector.load %arg9[%c0_30, %c0_31, %c0_32] : memref<1x1x32xf32, #tpu.memory_space<vmem>>, vector<1x1x32xf32>
    %135 = vector.shape_cast %134 : vector<1x1x32xf32> to vector<1x32xf32>
    %c0_33 = arith.constant 0 : index
    %c0_34 = arith.constant 0 : index
    %c0_35 = arith.constant 0 : index
    %136 = vector.load %arg10[%c0_33, %c0_34, %c0_35] : memref<1x1x32xf32, #tpu.memory_space<vmem>>, vector<1x1x32xf32>
    %137 = vector.shape_cast %136 : vector<1x1x32xf32> to vector<1x32xf32>
    %cst_36 = arith.constant dense<0.000000e+00> : vector<16xf32>
    %138 = vector.multi_reduction <add>, %133, %cst_36 [1] : vector<16x32xf32> to vector<16xf32>
    %139 = vector.shape_cast %138 : vector<16xf32> to vector<16x1xf32>
    %cst_37 = arith.constant 3.200000e+01 : f32
    %140 = vector.broadcast %cst_37 : f32 to vector<16x1xf32>
    %141 = arith.divf %139, %140 : vector<16x1xf32>
    %142 = vector.broadcast %141 : vector<16x1xf32> to vector<16x32xf32>
    %143 = arith.subf %133, %142 : vector<16x32xf32>
    %144 = arith.mulf %143, %143 : vector<16x32xf32>
    %cst_38 = arith.constant dense<0.000000e+00> : vector<16xf32>
    %145 = vector.multi_reduction <add>, %144, %cst_38 [1] : vector<16x32xf32> to vector<16xf32>
    %146 = vector.shape_cast %145 : vector<16xf32> to vector<16x1xf32>
    %cst_39 = arith.constant 0.0322580636 : f32
    %147 = vector.broadcast %cst_39 : f32 to vector<16x1xf32>
    %148 = arith.mulf %146, %147 : vector<16x1xf32>
    %149 = math.sqrt %148 : vector<16x1xf32>
    %cst_40 = arith.constant 9.99999997E-7 : f32
    %150 = vector.broadcast %cst_40 : f32 to vector<16x1xf32>
    %151 = arith.addf %149, %150 : vector<16x1xf32>
    %152 = tpu.reciprocal %151 {approx = true} : vector<16x1xf32> -> vector<16x1xf32>
    %153 = vector.broadcast %141 : vector<16x1xf32> to vector<16x32xf32>
    %154 = arith.subf %133, %153 : vector<16x32xf32>
    %155 = vector.broadcast %135 : vector<1x32xf32> to vector<16x32xf32>
    %156 = arith.mulf %155, %154 : vector<16x32xf32>
    %157 = vector.broadcast %152 : vector<16x1xf32> to vector<16x32xf32>
    %158 = arith.mulf %156, %157 : vector<16x32xf32>
    %159 = vector.broadcast %137 : vector<1x32xf32> to vector<16x32xf32>
    %160 = arith.addf %158, %159 : vector<16x32xf32>
    %161 = arith.truncf %160 : vector<16x32xf32> to vector<16x32xbf16>
    %c0_41 = arith.constant 0 : index
    %c0_42 = arith.constant 0 : index
    %c0_43 = arith.constant 0 : index
    %162 = vector.load %arg11[%c0_41, %c0_42, %c0_43] : memref<1x32x64xbf16, #tpu.memory_space<vmem>>, vector<1x32x64xbf16>
    %163 = vector.shape_cast %162 : vector<1x32x64xbf16> to vector<32x64xbf16>
    %cst_44 = arith.constant dense<0.000000e+00> : vector<16x64xf32>
    %164 = tpu.matmul %161, %163, %cst_44 {dimension_numbers = #tpu.dot_dimension_numbers<[1], [0], [0], [1], [0, 0, 1, 1], [], []>} : vector<16x32xbf16>, vector<32x64xbf16>, vector<16x64xf32> -> vector<16x64xf32>
    %c0_45 = arith.constant 0 : index
    %c0_46 = arith.constant 0 : index
    %c0_47 = arith.constant 0 : index
    %165 = vector.load %arg12[%c0_45, %c0_46, %c0_47] : memref<1x1x64xf32, #tpu.memory_space<vmem>>, vector<1x1x64xf32>
    %166 = vector.shape_cast %165 : vector<1x1x64xf32> to vector<1x64xf32>
    %167 = vector.broadcast %166 : vector<1x64xf32> to vector<16x64xf32>
    %168 = arith.addf %164, %167 : vector<16x64xf32>
    %cst_48 = arith.constant 0.000000e+00 : f32
    %169 = vector.broadcast %cst_48 : f32 to vector<16x64xf32>
    %170 = arith.maximumf %168, %169 : vector<16x64xf32>
    %171 = arith.truncf %170 : vector<16x64xf32> to vector<16x64xbf16>
    %c0_49 = arith.constant 0 : index
    %c0_50 = arith.constant 0 : index
    %c0_51 = arith.constant 0 : index
    %172 = vector.load %arg13[%c0_49, %c0_50, %c0_51] : memref<1x64x32xbf16, #tpu.memory_space<vmem>>, vector<1x64x32xbf16>
    %173 = vector.shape_cast %172 : vector<1x64x32xbf16> to vector<64x32xbf16>
    %cst_52 = arith.constant dense<0.000000e+00> : vector<16x32xf32>
    %174 = tpu.matmul %171, %173, %cst_52 {dimension_numbers = #tpu.dot_dimension_numbers<[1], [0], [0], [1], [0, 0, 1, 1], [], []>} : vector<16x64xbf16>, vector<64x32xbf16>, vector<16x32xf32> -> vector<16x32xf32>
    %c0_53 = arith.constant 0 : index
    %c0_54 = arith.constant 0 : index
    %c0_55 = arith.constant 0 : index
    %175 = vector.load %arg14[%c0_53, %c0_54, %c0_55] : memref<1x1x32xf32, #tpu.memory_space<vmem>>, vector<1x1x32xf32>
    %176 = vector.shape_cast %175 : vector<1x1x32xf32> to vector<1x32xf32>
    %177 = vector.broadcast %176 : vector<1x32xf32> to vector<16x32xf32>
    %178 = arith.addf %174, %177 : vector<16x32xf32>
    %179 = arith.addf %133, %178 : vector<16x32xf32>
    %c0_56 = arith.constant 0 : index
    %c0_57 = arith.constant 0 : index
    %180 = vector.load %arg18[%c0_56, %c0_57] : memref<16x32xf32, #tpu.memory_space<vmem>>, vector<16x32xf32>
    tpu.vector_store %arg18[%c0_56, %c0_57], %179 {strides = array<i32>} : memref<16x32xf32, #tpu.memory_space<vmem>>, vector<16x32xf32>,
    %c1_i32 = arith.constant 1 : i32
    %181 = arith.cmpi eq, %arg1, %c1_i32 : i32
    %182 = arith.extui %181 : i1 to i32
    %c0_i32_58 = arith.constant 0 : i32
    %183 = arith.cmpi ne, %182, %c0_i32_58 : i32
    scf.if %183 {
      %c0_59 = arith.constant 0 : index
      %c0_60 = arith.constant 0 : index
      %184 = vector.load %arg15[%c0_59, %c0_60] : memref<1x32xf32, #tpu.memory_space<vmem>>, vector<1x32xf32>
      %c0_61 = arith.constant 0 : index
      %c0_62 = arith.constant 0 : index
      %185 = vector.load %arg16[%c0_61, %c0_62] : memref<1x32xf32, #tpu.memory_space<vmem>>, vector<1x32xf32>
      %cst_63 = arith.constant dense<0.000000e+00> : vector<16xf32>
      %186 = vector.multi_reduction <add>, %179, %cst_63 [1] : vector<16x32xf32> to vector<16xf32>
      %187 = vector.shape_cast %186 : vector<16xf32> to vector<16x1xf32>
      %cst_64 = arith.constant 3.200000e+01 : f32
      %188 = vector.broadcast %cst_64 : f32 to vector<16x1xf32>
      %189 = arith.divf %187, %188 : vector<16x1xf32>
      %190 = vector.broadcast %189 : vector<16x1xf32> to vector<16x32xf32>
      %191 = arith.subf %179, %190 : vector<16x32xf32>
      %192 = arith.mulf %191, %191 : vector<16x32xf32>
      %cst_65 = arith.constant dense<0.000000e+00> : vector<16xf32>
      %193 = vector.multi_reduction <add>, %192, %cst_65 [1] : vector<16x32xf32> to vector<16xf32>
      %194 = vector.shape_cast %193 : vector<16xf32> to vector<16x1xf32>
      %cst_66 = arith.constant 0.0322580636 : f32
      %195 = vector.broadcast %cst_66 : f32 to vector<16x1xf32>
      %196 = arith.mulf %194, %195 : vector<16x1xf32>
      %197 = math.sqrt %196 : vector<16x1xf32>
      %cst_67 = arith.constant 9.99999997E-7 : f32
      %198 = vector.broadcast %cst_67 : f32 to vector<16x1xf32>
      %199 = arith.addf %197, %198 : vector<16x1xf32>
      %200 = tpu.reciprocal %199 {approx = true} : vector<16x1xf32> -> vector<16x1xf32>
      %201 = vector.broadcast %189 : vector<16x1xf32> to vector<16x32xf32>
      %202 = arith.subf %179, %201 : vector<16x32xf32>
      %203 = vector.broadcast %184 : vector<1x32xf32> to vector<16x32xf32>
      %204 = arith.mulf %203, %202 : vector<16x32xf32>
      %205 = vector.broadcast %200 : vector<16x1xf32> to vector<16x32xf32>
      %206 = arith.mulf %204, %205 : vector<16x32xf32>
      %207 = vector.broadcast %185 : vector<1x32xf32> to vector<16x32xf32>
      %208 = arith.addf %206, %207 : vector<16x32xf32>
      %209 = vector.extract_strided_slice %208 {offsets = [0, 0], sizes = [8, 32], strides = [1, 1]} : vector<16x32xf32> to vector<8x32xf32>
      %c0_68 = arith.constant 0 : index
      %c0_69 = arith.constant 0 : index
      %c0_70 = arith.constant 0 : index
      %210 = vector.load %arg17[%c0_68, %c0_69, %c0_70] : memref<2x8x32xf32, #tpu.memory_space<vmem>>, vector<1x8x32xf32>
      %211 = vector.shape_cast %210 : vector<1x8x32xf32> to vector<8x32xf32>
      %212 = vector.shape_cast %209 : vector<8x32xf32> to vector<1x8x32xf32>
      tpu.vector_store %arg17[%c0_68, %c0_69, %c0_70], %212 {strides = array<i32>} : memref<2x8x32xf32, #tpu.memory_space<vmem>>, vector<1x8x32xf32>,
      %213 = vector.extract_strided_slice %208 {offsets = [8, 0], sizes = [8, 32], strides = [1, 1]} : vector<16x32xf32> to vector<8x32xf32>
      %c1 = arith.constant 1 : index
      %c0_71 = arith.constant 0 : index
      %c0_72 = arith.constant 0 : index
      %214 = vector.load %arg17[%c1, %c0_71, %c0_72] : memref<2x8x32xf32, #tpu.memory_space<vmem>>, vector<1x8x32xf32>
      %215 = vector.shape_cast %214 : vector<1x8x32xf32> to vector<8x32xf32>
      %216 = vector.shape_cast %213 : vector<8x32xf32> to vector<1x8x32xf32>
      tpu.vector_store %arg17[%c1, %c0_71, %c0_72], %216 {strides = array<i32>} : memref<2x8x32xf32, #tpu.memory_space<vmem>>, vector<1x8x32xf32>,
    } else {
    }
    return
  }
  func.func @transform_0(%arg0: i32, %arg1: i32) -> (i32, i32, i32) {
    %c0_i32 = arith.constant 0 : i32
    %c0_i32_0 = arith.constant 0 : i32
    %c0_i32_1 = arith.constant 0 : i32
    return %arg0, %c0_i32, %c0_i32_0 : i32, i32, i32
  }
  func.func @transform_1(%arg0: i32, %arg1: i32) -> (i32, i32, i32) {
    %c0_i32 = arith.constant 0 : i32
    %c0_i32_0 = arith.constant 0 : i32
    %c0_i32_1 = arith.constant 0 : i32
    return %arg1, %c0_i32, %c0_i32_0 : i32, i32, i32
  }
  func.func @transform_2(%arg0: i32, %arg1: i32) -> (i32, i32, i32) {
    %c0_i32 = arith.constant 0 : i32
    %c0_i32_0 = arith.constant 0 : i32
    %c0_i32_1 = arith.constant 0 : i32
    return %arg1, %c0_i32, %c0_i32_0 : i32, i32, i32
  }
  func.func @transform_3(%arg0: i32, %arg1: i32) -> (i32, i32, i32) {
    %c0_i32 = arith.constant 0 : i32
    %c0_i32_0 = arith.constant 0 : i32
    %c0_i32_1 = arith.constant 0 : i32
    return %arg1, %c0_i32, %c0_i32_0 : i32, i32, i32
  }
  func.func @transform_4(%arg0: i32, %arg1: i32) -> (i32, i32, i32) {
    %c0_i32 = arith.constant 0 : i32
    %c0_i32_0 = arith.constant 0 : i32
    %c0_i32_1 = arith.constant 0 : i32
    return %arg1, %c0_i32, %c0_i32_0 : i32, i32, i32
  }
  func.func @transform_5(%arg0: i32, %arg1: i32) -> (i32, i32, i32) {
    %c0_i32 = arith.constant 0 : i32
    %c0_i32_0 = arith.constant 0 : i32
    %c0_i32_1 = arith.constant 0 : i32
    return %arg1, %c0_i32, %c0_i32_0 : i32, i32, i32
  }
  func.func @transform_6(%arg0: i32, %arg1: i32) -> (i32, i32, i32) {
    %c0_i32 = arith.constant 0 : i32
    %c0_i32_0 = arith.constant 0 : i32
    %c0_i32_1 = arith.constant 0 : i32
    return %arg1, %c0_i32, %c0_i32_0 : i32, i32, i32
  }
  func.func @transform_7(%arg0: i32, %arg1: i32) -> (i32, i32, i32) {
    %c0_i32 = arith.constant 0 : i32
    %c0_i32_0 = arith.constant 0 : i32
    %c0_i32_1 = arith.constant 0 : i32
    return %arg1, %c0_i32, %c0_i32_0 : i32, i32, i32
  }
  func.func @transform_8(%arg0: i32, %arg1: i32) -> (i32, i32, i32) {
    %c0_i32 = arith.constant 0 : i32
    %c0_i32_0 = arith.constant 0 : i32
    %c0_i32_1 = arith.constant 0 : i32
    return %arg1, %c0_i32, %c0_i32_0 : i32, i32, i32
  }
  func.func @transform_9(%arg0: i32, %arg1: i32) -> (i32, i32, i32) {
    %c0_i32 = arith.constant 0 : i32
    %c0_i32_0 = arith.constant 0 : i32
    %c0_i32_1 = arith.constant 0 : i32
    return %arg1, %c0_i32, %c0_i32_0 : i32, i32, i32
  }
  func.func @transform_10(%arg0: i32, %arg1: i32) -> (i32, i32, i32) {
    %c0_i32 = arith.constant 0 : i32
    %c0_i32_0 = arith.constant 0 : i32
    %c0_i32_1 = arith.constant 0 : i32
    return %arg1, %c0_i32, %c0_i32_0 : i32, i32, i32
  }
  func.func @transform_11(%arg0: i32, %arg1: i32) -> (i32, i32, i32) {
    %c0_i32 = arith.constant 0 : i32
    %c0_i32_0 = arith.constant 0 : i32
    %c0_i32_1 = arith.constant 0 : i32
    return %arg1, %c0_i32, %c0_i32_0 : i32, i32, i32
  }
  func.func @transform_12(%arg0: i32, %arg1: i32) -> (i32, i32, i32) {
    %c0_i32 = arith.constant 0 : i32
    %c0_i32_0 = arith.constant 0 : i32
    %c0_i32_1 = arith.constant 0 : i32
    return %arg1, %c0_i32, %c0_i32_0 : i32, i32, i32
  }
  func.func @transform_13(%arg0: i32, %arg1: i32) -> (i32, i32) {
    %c0_i32 = arith.constant 0 : i32
    %c0_i32_0 = arith.constant 0 : i32
    %c0_i32_1 = arith.constant 0 : i32
    return %c0_i32, %c0_i32_0 : i32, i32
  }
  func.func @transform_14(%arg0: i32, %arg1: i32) -> (i32, i32) {
    %c0_i32 = arith.constant 0 : i32
    %c0_i32_0 = arith.constant 0 : i32
    %c0_i32_1 = arith.constant 0 : i32
    return %c0_i32, %c0_i32_0 : i32, i32
  }
  func.func @transform_15(%arg0: i32, %arg1: i32) -> (i32, i32, i32) {
    %c0_i32 = arith.constant 0 : i32
    %c0_i32_0 = arith.constant 0 : i32
    %c0_i32_1 = arith.constant 0 : i32
    return %arg0, %c0_i32, %c0_i32_0 : i32, i32, i32
  }
}

</mosaic_0001>

<llo_original>
// kernel: tpu_custom_call.1
$region0: #{tpu_custom_call.1}
  #allocation0 [shape = 'u32[]', space=smem, size = 0x4, offset = 0x4, fixed_abs, tag = 'smem constant byte address 0x4 - core index']
  #allocation1 [shape = 'u32[144,128]{1,0:T(1,128)}', space=vmem, size = 0x12000, scoped, tag = 'internal scratch']
  #allocation2 [shape = 'f32[16,32]{1,0:T(8,128)}', space=vmem, size = 0x2000, scoped, tag = 'scratch operand']
  %s0 = inlined_call_operand.hbm [shape: f32[2,8,32], index: 0, kind: input, shape index: {}]
  %s1 = inlined_call_operand.hbm [shape: f32[2,1,32], index: 1, kind: input, shape index: {}]
  %s2 = inlined_call_operand.hbm [shape: f32[2,1,32], index: 2, kind: input, shape index: {}]
  %s3 = inlined_call_operand.hbm [shape: bf16[2,32,96], index: 3, kind: input, shape index: {}]
  %s4 = inlined_call_operand.hbm [shape: f32[2,1,96], index: 4, kind: input, shape index: {}]
  %s5 = inlined_call_operand.hbm [shape: bf16[2,32,32], index: 5, kind: input, shape index: {}]
  %s6 = inlined_call_operand.hbm [shape: f32[2,1,32], index: 6, kind: input, shape index: {}]
  %s7 = inlined_call_operand.hbm [shape: f32[2,1,32], index: 7, kind: input, shape index: {}]
  %s8 = inlined_call_operand.hbm [shape: f32[2,1,32], index: 8, kind: input, shape index: {}]
  %s9 = inlined_call_operand.hbm [shape: bf16[2,32,64], index: 9, kind: input, shape index: {}]
  %s10 = inlined_call_operand.hbm [shape: f32[2,1,64], index: 10, kind: input, shape index: {}]
  %s11 = inlined_call_operand.hbm [shape: bf16[2,64,32], index: 11, kind: input, shape index: {}]
  %s12 = inlined_call_operand.hbm [shape: f32[2,1,32], index: 12, kind: input, shape index: {}]
  %s13 = inlined_call_operand.hbm [shape: f32[1,32], index: 13, kind: input, shape index: {}]
  %s14 = inlined_call_operand.hbm [shape: f32[1,32], index: 14, kind: input, shape index: {}]
  %s15 = inlined_call_operand.hbm [shape: f32[2,8,32], index: 15, kind: output, shape index: {}]
  %s16 = sld [smem:[#allocation0]]
  $region161: #{tpu_custom_call.1} parent=0
    _
  %s18 = ssub.s32 1, %s16
  %s19 = scalar_select 0, %s18, %s16
  $region1: #{tpu_custom_call.1} parent=0
    #allocation3 [shape = 'u8[8192]{0}', space=vmem, size = 0x2000, scoped, tag = 'input window, operand 0, single buffered']
    #allocation4 [shape = 's32[2]{0}', space=sflag, size = 0x8, scoped, tag = 'scoped memory for tpu_custom_call.1']
    #allocation5 [shape = 's32[2]{0}', space=sflag, size = 0x8, scoped, tag = 'scoped memory for tpu_custom_call.1']
    #allocation6 [shape = 'u8[1024]{0}', space=vmem, size = 0x400, scoped, tag = 'input window, operand 1']
    #allocation7 [shape = 's32[2]{0}', space=sflag, size = 0x8, scoped, tag = 'scoped memory for tpu_custom_call.1']
    #allocation8 [shape = 'u8[1024]{0}', space=vmem, size = 0x400, scoped, tag = 'input window, operand 2']
    #allocation9 [shape = 'u8[16384]{0}', space=vmem, size = 0x4000, scoped, tag = 'input window, operand 3']
    #allocation10 [shape = 's32[2]{0}', space=sflag, size = 0x8, scoped, tag = 'scoped memory for tpu_custom_call.1']
    #allocation11 [shape = 'u8[1024]{0}', space=vmem, size = 0x400, scoped, tag = 'input window, operand 4']
    #allocation12 [shape = 'u8[16384]{0}', space=vmem, size = 0x4000, scoped, tag = 'input window, operand 5']
    #allocation13 [shape = 's32[2]{0}', space=sflag, size = 0x8, scoped, tag = 'scoped memory for tpu_custom_call.1']
    #allocation14 [shape = 'u8[1024]{0}', space=vmem, size = 0x400, scoped, tag = 'input window, operand 6']
    #allocation15 [shape = 'u8[1024]{0}', space=vmem, size = 0x400, scoped, tag = 'input window, operand 7']
    #allocation16 [shape = 's32[2]{0}', space=sflag, size = 0x8, scoped, tag = 'scoped memory for tpu_custom_call.1']
    #allocation17 [shape = 'u8[1024]{0}', space=vmem, size = 0x400, scoped, tag = 'input window, operand 8']
    #allocation18 [shape = 'u8[16384]{0}', space=vmem, size = 0x4000, scoped, tag = 'input window, operand 9']
    #allocation19 [shape = 's32[2]{0}', space=sflag, size = 0x8, scoped, tag = 'scoped memory for tpu_custom_call.1']
    #allocation20 [shape = 'u8[1024]{0}', space=vmem, size = 0x400, scoped, tag = 'input window, operand 10']
    #allocation21 [shape = 'u8[32768]{0}', space=vmem, size = 0x8000, scoped, tag = 'input window, operand 11']
    #allocation22 [shape = 's32[2]{0}', space=sflag, size = 0x8, scoped, tag = 'scoped memory for tpu_custom_call.1']
    #allocation23 [shape = 'u8[1024]{0}', space=vmem, size = 0x400, scoped, tag = 'input window, operand 12']
    #allocation24 [shape = 'u8[512]{0}', space=vmem, size = 0x400, scoped, tag = 'input window, operand 13, single buffered']
    #allocation25 [shape = 's32[1]{0}', space=sflag, size = 0x4, scoped, tag = 'scoped memory for tpu_custom_call.1']
    #allocation26 [shape = 'u8[512]{0}', space=vmem, size = 0x400, scoped, tag = 'input window, operand 14, single buffered']
    #allocation27 [shape = 'u8[8192]{0}', space=vmem, size = 0x2000, scoped, tag = 'output window, operand 0, single buffered']
    %20 = vsyncpa [#allocation4], 0
    %21 = vsyncpa [#allocation7], 0
    %s22 = scalar_lea.sflag [#allocation7], 1
    %23 = vsyncpa %s22, 0
    %24 = vsyncpa [#allocation10], 0
    %s25 = scalar_lea.sflag [#allocation10], 1
    %26 = vsyncpa %s25, 0
    %27 = vsyncpa [#allocation13], 0
    %s28 = scalar_lea.sflag [#allocation13], 1
    %29 = vsyncpa %s28, 0
    %30 = vsyncpa [#allocation16], 0
    %s31 = scalar_lea.sflag [#allocation16], 1
    %32 = vsyncpa %s31, 0
    %33 = vsyncpa [#allocation19], 0
    %s34 = scalar_lea.sflag [#allocation19], 1
    %35 = vsyncpa %s34, 0
    %36 = vsyncpa [#allocation22], 0
    %s37 = scalar_lea.sflag [#allocation22], 1
    %38 = vsyncpa %s37, 0
    %39 = vsyncpa [#allocation25], 0
    %40 = vsyncpa [#allocation5], 0
    loop: start=0, step=1, limit=4
    $region2: #{tpu_custom_call.1} parent=1 // loop_pre_header
      _
    $region3: #{tpu_custom_call.1} parent=1 // loop_header
      %s42 = sphi 0, %s46
      %p43 = scmp.ge.s32.totalorder %s42, 4
      %s49 = sphi 0, %s61
      %s50 = sphi 0, %s57
      %s51 = sphi 0, %s49
      %s52 = sphi 0, %s50
      %s53 = sphi 0, %s51
      %s54 = sphi 0, %s52
      %s64 = sphi 0, %s66
      %s67 = sphi 0, %s64
      %s68 = sphi 0, %s67
      %s84 = sphi 0, %s68
      %s90 = sphi 0, %s92
      %s93 = sphi 0, %s90
      %s94 = sphi 0, %s93
      %s110 = sphi 0, %s94
      %s116 = sphi 0, %s118
      %s119 = sphi 0, %s116
      %s120 = sphi 0, %s119
      %s136 = sphi 0, %s120
      %s142 = sphi 0, %s144
      %s145 = sphi 0, %s142
      %s146 = sphi 0, %s145
      %s162 = sphi 0, %s146
      %s168 = sphi 0, %s170
      %s171 = sphi 0, %s168
      %s172 = sphi 0, %s171
      %s188 = sphi 0, %s172
      %s194 = sphi 0, %s196
      %s197 = sphi 0, %s194
      %s198 = sphi 0, %s197
      %s214 = sphi 0, %s198
      %s220 = sphi 0, %s222
      %s223 = sphi 0, %s220
      %s224 = sphi 0, %s223
      %s240 = sphi 0, %s224
      %s246 = sphi 0, %s248
      %s249 = sphi 0, %s246
      %s250 = sphi 0, %s249
      %s266 = sphi 0, %s250
      %s272 = sphi 0, %s274
      %s275 = sphi 0, %s272
      %s276 = sphi 0, %s275
      %s292 = sphi 0, %s276
      %s298 = sphi 0, %s300
      %s301 = sphi 0, %s298
      %s302 = sphi 0, %s301
      %s318 = sphi 0, %s302
      %s324 = sphi 0, %s326
      %s327 = sphi 0, %s324
      %s328 = sphi 0, %s327
      %s344 = sphi 0, %s328
      %s350 = sphi 0, %s352
      %s353 = sphi 0, %s350
      %s354 = sphi 0, %s353
      %s370 = sphi 0, %s354
      %s376 = sphi 0, %s378
      %s379 = sphi 0, %s376
      %s380 = sphi 0, %s379
      %s396 = sphi 0, %s380
      %s400 = sphi 0, %s400
      %s402 = sphi 0, %s400
      %s403 = sphi 0, %s402
      %s417 = sphi 0, %s403
      %s421 = sphi 0, %s421
      %s423 = sphi 0, %s421
      %s424 = sphi 0, %s423
      %s438 = sphi 0, %s424
      %s444 = sphi 0, %s446
      %s447 = sphi 0, %s444
      %s448 = sphi 0, %s447
      %s464 = sphi 0, %s448
    $region4: #{tpu_custom_call.1} parent=1 // loop_header_branch
      %45 = sbr.rel (%p43) target = $region8
    $region5: #{tpu_custom_call.1} parent=1 // loop_body
      %s47 = ssub.s32 %s42, 1
      %s48 = ssub.s32 %s42, 2
      %s55 = sadd.s32 1, %s50
      %p56 = scmp.ge.s32.totalorder %s55, 2
      %s57 = scalar_select %p56, 0, %s55
      %s58 = sadd.s32 1, %s49
      %s59 = scalar_select %p56, %s58, %s49
      %p60 = scmp.ge.s32.totalorder %s59, 1
      %s61 = scalar_select %p60, 0, %s59
      %s62 = ssub.s32 %s49, %s61
      %p63 = scmp.eq.s32.totalorder %s62, 0
      %s65 = sadd.s32 %s64, 1
      %s66 = scalar_select %p63, %s64, %s65
      %p69 = pneg %p63
      %p70 = scmp.eq.s32.totalorder %s42, 1
      %p71 = por %p69, %p70
      %p72 = scmp.ne.s32.totalorder %s64, %s67
      %p73 = scmp.eq.s32.totalorder %s42, 0
      %p74 = por %p72, %p73
      %p75 = scmp.ne.s32.totalorder %s64, %s67
      %p76 = scmp.eq.s32.totalorder %s47, 1
      %p77 = por %p75, %p76
      %p78 = scmp.ne.s32.totalorder %s67, %s68
      %p79 = scmp.eq.s32.totalorder %s47, 0
      %p80 = por %p78, %p79
      %p81 = scmp.ne.s32.totalorder %s67, %s68
      %p82 = scmp.eq.s32.totalorder %s48, 1
      %p83 = por %p81, %p82
      %p85 = scmp.ne.s32.totalorder %s68, %s84
      %p86 = scmp.eq.s32.totalorder %s48, 0
      %p87 = por %p85, %p86
      %s88 = ssub.s32 %s50, %s57
      %p89 = scmp.eq.s32.totalorder %s88, 0
      %s91 = sadd.s32 %s90, 1
      %s92 = scalar_select %p89, %s90, %s91
      %p95 = pneg %p89
      %p96 = scmp.eq.s32.totalorder %s42, 1
      %p97 = por %p95, %p96
      %p98 = scmp.ne.s32.totalorder %s90, %s93
      %p99 = scmp.eq.s32.totalorder %s42, 0
      %p100 = por %p98, %p99
      %p101 = scmp.ne.s32.totalorder %s90, %s93
      %p102 = scmp.eq.s32.totalorder %s47, 1
      %p103 = por %p101, %p102
      %p104 = scmp.ne.s32.totalorder %s93, %s94
      %p105 = scmp.eq.s32.totalorder %s47, 0
      %p106 = por %p104, %p105
      %p107 = scmp.ne.s32.totalorder %s93, %s94
      %p108 = scmp.eq.s32.totalorder %s48, 1
      %p109 = por %p107, %p108
      %p111 = scmp.ne.s32.totalorder %s94, %s110
      %p112 = scmp.eq.s32.totalorder %s48, 0
      %p113 = por %p111, %p112
      %s114 = ssub.s32 %s50, %s57
      %p115 = scmp.eq.s32.totalorder %s114, 0
      %s117 = sadd.s32 %s116, 1
      %s118 = scalar_select %p115, %s116, %s117
      %p121 = pneg %p115
      %p122 = scmp.eq.s32.totalorder %s42, 1
      %p123 = por %p121, %p122
      %p124 = scmp.ne.s32.totalorder %s116, %s119
      %p125 = scmp.eq.s32.totalorder %s42, 0
      %p126 = por %p124, %p125
      %p127 = scmp.ne.s32.totalorder %s116, %s119
      %p128 = scmp.eq.s32.totalorder %s47, 1
      %p129 = por %p127, %p128
      %p130 = scmp.ne.s32.totalorder %s119, %s120
      %p131 = scmp.eq.s32.totalorder %s47, 0
      %p132 = por %p130, %p131
      %p133 = scmp.ne.s32.totalorder %s119, %s120
      %p134 = scmp.eq.s32.totalorder %s48, 1
      %p135 = por %p133, %p134
      %p137 = scmp.ne.s32.totalorder %s120, %s136
      %p138 = scmp.eq.s32.totalorder %s48, 0
      %p139 = por %p137, %p138
      %s140 = ssub.s32 %s50, %s57
      %p141 = scmp.eq.s32.totalorder %s140, 0
      %s143 = sadd.s32 %s142, 1
      %s144 = scalar_select %p141, %s142, %s143
      %p147 = pneg %p141
      %p148 = scmp.eq.s32.totalorder %s42, 1
      %p149 = por %p147, %p148
      %p150 = scmp.ne.s32.totalorder %s142, %s145
      %p151 = scmp.eq.s32.totalorder %s42, 0
      %p152 = por %p150, %p151
      %p153 = scmp.ne.s32.totalorder %s142, %s145
      %p154 = scmp.eq.s32.totalorder %s47, 1
      %p155 = por %p153, %p154
      %p156 = scmp.ne.s32.totalorder %s145, %s146
      %p157 = scmp.eq.s32.totalorder %s47, 0
      %p158 = por %p156, %p157
      %p159 = scmp.ne.s32.totalorder %s145, %s146
      %p160 = scmp.eq.s32.totalorder %s48, 1
      %p161 = por %p159, %p160
      %p163 = scmp.ne.s32.totalorder %s146, %s162
      %p164 = scmp.eq.s32.totalorder %s48, 0
      %p165 = por %p163, %p164
      %s166 = ssub.s32 %s50, %s57
      %p167 = scmp.eq.s32.totalorder %s166, 0
      %s169 = sadd.s32 %s168, 1
      %s170 = scalar_select %p167, %s168, %s169
      %p173 = pneg %p167
      %p174 = scmp.eq.s32.totalorder %s42, 1
      %p175 = por %p173, %p174
      %p176 = scmp.ne.s32.totalorder %s168, %s171
      %p177 = scmp.eq.s32.totalorder %s42, 0
      %p178 = por %p176, %p177
      %p179 = scmp.ne.s32.totalorder %s168, %s171
      %p180 = scmp.eq.s32.totalorder %s47, 1
      %p181 = por %p179, %p180
      %p182 = scmp.ne.s32.totalorder %s171, %s172
      %p183 = scmp.eq.s32.totalorder %s47, 0
      %p184 = por %p182, %p183
      %p185 = scmp.ne.s32.totalorder %s171, %s172
      %p186 = scmp.eq.s32.totalorder %s48, 1
      %p187 = por %p185, %p186
      %p189 = scmp.ne.s32.totalorder %s172, %s188
      %p190 = scmp.eq.s32.totalorder %s48, 0
      %p191 = por %p189, %p190
      %s192 = ssub.s32 %s50, %s57
      %p193 = scmp.eq.s32.totalorder %s192, 0
      %s195 = sadd.s32 %s194, 1
      %s196 = scalar_select %p193, %s194, %s195
      %p199 = pneg %p193
      %p200 = scmp.eq.s32.totalorder %s42, 1
      %p201 = por %p199, %p200
      %p202 = scmp.ne.s32.totalorder %s194, %s197
      %p203 = scmp.eq.s32.totalorder %s42, 0
      %p204 = por %p202, %p203
      %p205 = scmp.ne.s32.totalorder %s194, %s197
      %p206 = scmp.eq.s32.totalorder %s47, 1
      %p207 = por %p205, %p206
      %p208 = scmp.ne.s32.totalorder %s197, %s198
      %p209 = scmp.eq.s32.totalorder %s47, 0
      %p210 = por %p208, %p209
      %p211 = scmp.ne.s32.totalorder %s197, %s198
      %p212 = scmp.eq.s32.totalorder %s48, 1
      %p213 = por %p211, %p212
      %p215 = scmp.ne.s32.totalorder %s198, %s214
      %p216 = scmp.eq.s32.totalorder %s48, 0
      %p217 = por %p215, %p216
      %s218 = ssub.s32 %s50, %s57
      %p219 = scmp.eq.s32.totalorder %s218, 0
      %s221 = sadd.s32 %s220, 1
      %s222 = scalar_select %p219, %s220, %s221
      %p225 = pneg %p219
      %p226 = scmp.eq.s32.totalorder %s42, 1
      %p227 = por %p225, %p226
      %p228 = scmp.ne.s32.totalorder %s220, %s223
      %p229 = scmp.eq.s32.totalorder %s42, 0
      %p230 = por %p228, %p229
      %p231 = scmp.ne.s32.totalorder %s220, %s223
      %p232 = scmp.eq.s32.totalorder %s47, 1
      %p233 = por %p231, %p232
      %p234 = scmp.ne.s32.totalorder %s223, %s224
      %p235 = scmp.eq.s32.totalorder %s47, 0
      %p236 = por %p234, %p235
      %p237 = scmp.ne.s32.totalorder %s223, %s224
      %p238 = scmp.eq.s32.totalorder %s48, 1
      %p239 = por %p237, %p238
      %p241 = scmp.ne.s32.totalorder %s224, %s240
      %p242 = scmp.eq.s32.totalorder %s48, 0
      %p243 = por %p241, %p242
      %s244 = ssub.s32 %s50, %s57
      %p245 = scmp.eq.s32.totalorder %s244, 0
      %s247 = sadd.s32 %s246, 1
      %s248 = scalar_select %p245, %s246, %s247
      %p251 = pneg %p245
      %p252 = scmp.eq.s32.totalorder %s42, 1
      %p253 = por %p251, %p252
      %p254 = scmp.ne.s32.totalorder %s246, %s249
      %p255 = scmp.eq.s32.totalorder %s42, 0
      %p256 = por %p254, %p255
      %p257 = scmp.ne.s32.totalorder %s246, %s249
      %p258 = scmp.eq.s32.totalorder %s47, 1
      %p259 = por %p257, %p258
      %p260 = scmp.ne.s32.totalorder %s249, %s250
      %p261 = scmp.eq.s32.totalorder %s47, 0
      %p262 = por %p260, %p261
      %p263 = scmp.ne.s32.totalorder %s249, %s250
      %p264 = scmp.eq.s32.totalorder %s48, 1
      %p265 = por %p263, %p264
      %p267 = scmp.ne.s32.totalorder %s250, %s266
      %p268 = scmp.eq.s32.totalorder %s48, 0
      %p269 = por %p267, %p268
      %s270 = ssub.s32 %s50, %s57
      %p271 = scmp.eq.s32.totalorder %s270, 0
      %s273 = sadd.s32 %s272, 1
      %s274 = scalar_select %p271, %s272, %s273
      %p277 = pneg %p271
      %p278 = scmp.eq.s32.totalorder %s42, 1
      %p279 = por %p277, %p278
      %p280 = scmp.ne.s32.totalorder %s272, %s275
      %p281 = scmp.eq.s32.totalorder %s42, 0
      %p282 = por %p280, %p281
      %p283 = scmp.ne.s32.totalorder %s272, %s275
      %p284 = scmp.eq.s32.totalorder %s47, 1
      %p285 = por %p283, %p284
      %p286 = scmp.ne.s32.totalorder %s275, %s276
      %p287 = scmp.eq.s32.totalorder %s47, 0
      %p288 = por %p286, %p287
      %p289 = scmp.ne.s32.totalorder %s275, %s276
      %p290 = scmp.eq.s32.totalorder %s48, 1
      %p291 = por %p289, %p290
      %p293 = scmp.ne.s32.totalorder %s276, %s292
      %p294 = scmp.eq.s32.totalorder %s48, 0
      %p295 = por %p293, %p294
      %s296 = ssub.s32 %s50, %s57
      %p297 = scmp.eq.s32.totalorder %s296, 0
      %s299 = sadd.s32 %s298, 1
      %s300 = scalar_select %p297, %s298, %s299
      %p303 = pneg %p297
      %p304 = scmp.eq.s32.totalorder %s42, 1
      %p305 = por %p303, %p304
      %p306 = scmp.ne.s32.totalorder %s298, %s301
      %p307 = scmp.eq.s32.totalorder %s42, 0
      %p308 = por %p306, %p307
      %p309 = scmp.ne.s32.totalorder %s298, %s301
      %p310 = scmp.eq.s32.totalorder %s47, 1
      %p311 = por %p309, %p310
      %p312 = scmp.ne.s32.totalorder %s301, %s302
      %p313 = scmp.eq.s32.totalorder %s47, 0
      %p314 = por %p312, %p313
      %p315 = scmp.ne.s32.totalorder %s301, %s302
      %p316 = scmp.eq.s32.totalorder %s48, 1
      %p317 = por %p315, %p316
      %p319 = scmp.ne.s32.totalorder %s302, %s318
      %p320 = scmp.eq.s32.totalorder %s48, 0
      %p321 = por %p319, %p320
      %s322 = ssub.s32 %s50, %s57
      %p323 = scmp.eq.s32.totalorder %s322, 0
      %s325 = sadd.s32 %s324, 1
      %s326 = scalar_select %p323, %s324, %s325
      %p329 = pneg %p323
      %p330 = scmp.eq.s32.totalorder %s42, 1
      %p331 = por %p329, %p330
      %p332 = scmp.ne.s32.totalorder %s324, %s327
      %p333 = scmp.eq.s32.totalorder %s42, 0
      %p334 = por %p332, %p333
      %p335 = scmp.ne.s32.totalorder %s324, %s327
      %p336 = scmp.eq.s32.totalorder %s47, 1
      %p337 = por %p335, %p336
      %p338 = scmp.ne.s32.totalorder %s327, %s328
      %p339 = scmp.eq.s32.totalorder %s47, 0
      %p340 = por %p338, %p339
      %p341 = scmp.ne.s32.totalorder %s327, %s328
      %p342 = scmp.eq.s32.totalorder %s48, 1
      %p343 = por %p341, %p342
      %p345 = scmp.ne.s32.totalorder %s328, %s344
      %p346 = scmp.eq.s32.totalorder %s48, 0
      %p347 = por %p345, %p346
      %s348 = ssub.s32 %s50, %s57
      %p349 = scmp.eq.s32.totalorder %s348, 0
      %s351 = sadd.s32 %s350, 1
      %s352 = scalar_select %p349, %s350, %s351
      %p355 = pneg %p349
      %p356 = scmp.eq.s32.totalorder %s42, 1
      %p357 = por %p355, %p356
      %p358 = scmp.ne.s32.totalorder %s350, %s353
      %p359 = scmp.eq.s32.totalorder %s42, 0
      %p360 = por %p358, %p359
      %p361 = scmp.ne.s32.totalorder %s350, %s353
      %p362 = scmp.eq.s32.totalorder %s47, 1
      %p363 = por %p361, %p362
      %p364 = scmp.ne.s32.totalorder %s353, %s354
      %p365 = scmp.eq.s32.totalorder %s47, 0
      %p366 = por %p364, %p365
      %p367 = scmp.ne.s32.totalorder %s353, %s354
      %p368 = scmp.eq.s32.totalorder %s48, 1
      %p369 = por %p367, %p368
      %p371 = scmp.ne.s32.totalorder %s354, %s370
      %p372 = scmp.eq.s32.totalorder %s48, 0
      %p373 = por %p371, %p372
      %s374 = ssub.s32 %s50, %s57
      %p375 = scmp.eq.s32.totalorder %s374, 0
      %s377 = sadd.s32 %s376, 1
      %s378 = scalar_select %p375, %s376, %s377
      %p381 = pneg %p375
      %p382 = scmp.eq.s32.totalorder %s42, 1
      %p383 = por %p381, %p382
      %p384 = scmp.ne.s32.totalorder %s376, %s379
      %p385 = scmp.eq.s32.totalorder %s42, 0
      %p386 = por %p384, %p385
      %p387 = scmp.ne.s32.totalorder %s376, %s379
      %p388 = scmp.eq.s32.totalorder %s47, 1
      %p389 = por %p387, %p388
      %p390 = scmp.ne.s32.totalorder %s379, %s380
      %p391 = scmp.eq.s32.totalorder %s47, 0
      %p392 = por %p390, %p391
      %p393 = scmp.ne.s32.totalorder %s379, %s380
      %p394 = scmp.eq.s32.totalorder %s48, 1
      %p395 = por %p393, %p394
      %p397 = scmp.ne.s32.totalorder %s380, %s396
      %p398 = scmp.eq.s32.totalorder %s48, 0
      %p399 = por %p397, %p398
      %s401 = sadd.s32 %s400, 1
      %p404 = scmp.eq.s32.totalorder %s42, 1
      %p405 = scmp.ne.s32.totalorder %s400, %s402
      %p406 = scmp.eq.s32.totalorder %s42, 0
      %p407 = por %p405, %p406
      %p408 = scmp.ne.s32.totalorder %s400, %s402
      %p409 = scmp.eq.s32.totalorder %s47, 1
      %p410 = por %p408, %p409
      %p411 = scmp.ne.s32.totalorder %s402, %s403
      %p412 = scmp.eq.s32.totalorder %s47, 0
      %p413 = por %p411, %p412
      %p414 = scmp.ne.s32.totalorder %s402, %s403
      %p415 = scmp.eq.s32.totalorder %s48, 1
      %p416 = por %p414, %p415
      %p418 = scmp.ne.s32.totalorder %s403, %s417
      %p419 = scmp.eq.s32.totalorder %s48, 0
      %p420 = por %p418, %p419
      %s422 = sadd.s32 %s421, 1
      %p425 = scmp.eq.s32.totalorder %s42, 1
      %p426 = scmp.ne.s32.totalorder %s421, %s423
      %p427 = scmp.eq.s32.totalorder %s42, 0
      %p428 = por %p426, %p427
      %p429 = scmp.ne.s32.totalorder %s421, %s423
      %p430 = scmp.eq.s32.totalorder %s47, 1
      %p431 = por %p429, %p430
      %p432 = scmp.ne.s32.totalorder %s423, %s424
      %p433 = scmp.eq.s32.totalorder %s47, 0
      %p434 = por %p432, %p433
      %p435 = scmp.ne.s32.totalorder %s423, %s424
      %p436 = scmp.eq.s32.totalorder %s48, 1
      %p437 = por %p435, %p436
      %p439 = scmp.ne.s32.totalorder %s424, %s438
      %p440 = scmp.eq.s32.totalorder %s48, 0
      %p441 = por %p439, %p440
      %s442 = ssub.s32 %s49, %s61
      %p443 = scmp.eq.s32.totalorder %s442, 0
      %s445 = sadd.s32 %s444, 1
      %s446 = scalar_select %p443, %s444, %s445
      %p449 = pneg %p443
      %p450 = scmp.eq.s32.totalorder %s42, 1
      %p451 = por %p449, %p450
      %p452 = scmp.ne.s32.totalorder %s444, %s447
      %p453 = scmp.eq.s32.totalorder %s42, 0
      %p454 = por %p452, %p453
      %p455 = scmp.ne.s32.totalorder %s444, %s447
      %p456 = scmp.eq.s32.totalorder %s47, 1
      %p457 = por %p455, %p456
      %p458 = scmp.ne.s32.totalorder %s447, %s448
      %p459 = scmp.eq.s32.totalorder %s47, 0
      %p460 = por %p458, %p459
      %p461 = scmp.ne.s32.totalorder %s447, %s448
      %p462 = scmp.eq.s32.totalorder %s48, 1
      %p463 = por %p461, %p462
      %p465 = scmp.ne.s32.totalorder %s448, %s464
      %p466 = scmp.eq.s32.totalorder %s48, 0
      %p467 = por %p465, %p466
      %p468 = scmp.le.s32.totalorder 1, %s42
      %p469 = scmp.lt.s32.totalorder %s42, 3
      %p470 = pnand %p468, %p469
      %p471 = pneg %p470
      // Predicated region
      $region9: #{tpu_custom_call.1} parent=5 // pred_check
        _
      $region10: #{tpu_custom_call.1} parent=5 // pred_check_branch
        %473 = sbr.rel (%p470) target = $region12
      $region11: #{tpu_custom_call.1} parent=5 // pred_region
        %s474 = ssub.s32 %s42, 1
        // Predicated region
        $region13: #{tpu_custom_call.1} parent=11 // pred_check
          %p475 = pneg %p80
        $region14: #{tpu_custom_call.1} parent=11 // pred_check_branch
          %477 = sbr.rel (%p475) target = $region16
        $region15: #{tpu_custom_call.1} parent=11 // pred_region
          %s478 = smul.u32 2, %s51
          %s480 = ssub.s32 256, 256
          %481 = vsyncadd [#allocation4], %s480
          %s482 = smul.addr %s478, 128
          %s483 = scalar_lea.hbm %s0, %s482
          %s484 = sshll.u32 [#allocation3], 4
          %s485 = int_to_ptr.vmem [resolvable:$true] %s484
          %490 = dma.hbm_to_vmem [thread:$0]  %s483, 256, %s485, [#allocation4], 128, 128, 8
        $region16: #{tpu_custom_call.1} parent=11 // pred_fallthru
          _
        // Predicated region
        $region17: #{tpu_custom_call.1} parent=11 // pred_check
          %p491 = pneg %p413
        $region18: #{tpu_custom_call.1} parent=11 // pred_check_branch
          %493 = sbr.rel (%p491) target = $region20
        $region19: #{tpu_custom_call.1} parent=11 // pred_region
          %s495 = ssub.s32 16, 16
          %496 = vsyncadd [#allocation25], %s495
          %s498 = sshll.u32 [#allocation24], 4
          %s499 = int_to_ptr.vmem [resolvable:$true] %s498
          %501 = dma.hbm_to_vmem [thread:$0]  %s13, 16, %s499, [#allocation25]
        $region20: #{tpu_custom_call.1} parent=11 // pred_fallthru
          _
        // Predicated region
        $region21: #{tpu_custom_call.1} parent=11 // pred_check
          %p502 = pneg %p434
        $region22: #{tpu_custom_call.1} parent=11 // pred_check_branch
          %504 = sbr.rel (%p502) target = $region24
        $region23: #{tpu_custom_call.1} parent=11 // pred_region
          %s506 = ssub.s32 16, 16
          %507 = vsyncadd [#allocation25], %s506
          %s509 = sshll.u32 [#allocation26], 4
          %s510 = int_to_ptr.vmem [resolvable:$true] %s509
          %512 = dma.hbm_to_vmem [thread:$0]  %s14, 16, %s510, [#allocation25]
        $region24: #{tpu_custom_call.1} parent=11 // pred_fallthru
          _
      $region12: #{tpu_custom_call.1} parent=5 // pred_fallthru
        _
      %p513 = scmp.lt.s32.totalorder %s42, 2
      // Predicated region
      $region25: #{tpu_custom_call.1} parent=5 // pred_check
        %p514 = pneg %p513
      $region26: #{tpu_custom_call.1} parent=5 // pred_check_branch
        %516 = sbr.rel (%p514) target = $region28
      $region27: #{tpu_custom_call.1} parent=5 // pred_region
        // Predicated region
        $region29: #{tpu_custom_call.1} parent=27 // pred_check
          %p517 = pneg %p100
        $region30: #{tpu_custom_call.1} parent=27 // pred_check_branch
          %519 = sbr.rel (%p517) target = $region32
        $region31: #{tpu_custom_call.1} parent=27 // pred_region
          %s520 = sand.u32 %s42, 1
          %s521 = scalar_lea.sflag [#allocation7], %s520
          %s522 = sand.u32 %s90, 1
          %s523 = scalar_lea.vmem [#allocation6], %s522
          %s525 = ssub.s32 16, 16
          %526 = vsyncadd %s521, %s525
          %s527 = smul.addr %s50, 16
          %s528 = scalar_lea.hbm %s1, %s527
          %s530 = sshll.u32 %s523, 4
          %s531 = int_to_ptr.vmem [resolvable:$true] %s530
          %533 = dma.hbm_to_vmem [thread:$0]  %s528, 16, %s531, %s521
        $region32: #{tpu_custom_call.1} parent=27 // pred_fallthru
          _
        // Predicated region
        $region33: #{tpu_custom_call.1} parent=27 // pred_check
          %p534 = pneg %p126
        $region34: #{tpu_custom_call.1} parent=27 // pred_check_branch
          %536 = sbr.rel (%p534) target = $region36
        $region35: #{tpu_custom_call.1} parent=27 // pred_region
          %s537 = sand.u32 %s42, 1
          %s538 = scalar_lea.sflag [#allocation7], %s537
          %s539 = sand.u32 %s116, 1
          %s540 = scalar_lea.vmem [#allocation8], %s539
          %s542 = ssub.s32 16, 16
          %543 = vsyncadd %s538, %s542
          %s544 = smul.addr %s50, 16
          %s545 = scalar_lea.hbm %s2, %s544
          %s547 = sshll.u32 %s540, 4
          %s548 = int_to_ptr.vmem [resolvable:$true] %s547
          %550 = dma.hbm_to_vmem [thread:$0]  %s545, 16, %s548, %s538
        $region36: #{tpu_custom_call.1} parent=27 // pred_fallthru
          _
        // Predicated region
        $region37: #{tpu_custom_call.1} parent=27 // pred_check
          %p551 = pneg %p152
        $region38: #{tpu_custom_call.1} parent=27 // pred_check_branch
          %553 = sbr.rel (%p551) target = $region40
        $region39: #{tpu_custom_call.1} parent=27 // pred_region
          %s554 = sand.u32 %s42, 1
          %s555 = scalar_lea.sflag [#allocation10], %s554
          %s556 = sand.u32 %s142, 1
          %s557 = smul.addr %s556, 16
          %s558 = scalar_lea.vmem [#allocation9], %s557
          %s560 = ssub.s32 256, 256
          %561 = vsyncadd %s555, %s560
          %s562 = smul.addr %s50, 4
          %s563 = smul.addr %s562, 64
          %s564 = scalar_lea.hbm %s3, %s563
          %s565 = sshll.u32 %s558, 4
          %s566 = int_to_ptr.vmem [resolvable:$true] %s565
          %571 = dma.hbm_to_vmem [thread:$0]  %s564, 256, %s566, %s555, 64, 64, 4
        $region40: #{tpu_custom_call.1} parent=27 // pred_fallthru
          _
        // Predicated region
        $region41: #{tpu_custom_call.1} parent=27 // pred_check
          %p572 = pneg %p178
        $region42: #{tpu_custom_call.1} parent=27 // pred_check_branch
          %574 = sbr.rel (%p572) target = $region44
        $region43: #{tpu_custom_call.1} parent=27 // pred_region
          %s575 = sand.u32 %s42, 1
          %s576 = scalar_lea.sflag [#allocation10], %s575
          %s577 = sand.u32 %s168, 1
          %s578 = scalar_lea.vmem [#allocation11], %s577
          %s580 = ssub.s32 16, 16
          %581 = vsyncadd %s576, %s580
          %s582 = smul.addr %s50, 16
          %s583 = scalar_lea.hbm %s4, %s582
          %s585 = sshll.u32 %s578, 4
          %s586 = int_to_ptr.vmem [resolvable:$true] %s585
          %588 = dma.hbm_to_vmem [thread:$0]  %s583, 16, %s586, %s576
        $region44: #{tpu_custom_call.1} parent=27 // pred_fallthru
          _
        // Predicated region
        $region45: #{tpu_custom_call.1} parent=27 // pred_check
          %p589 = pneg %p204
        $region46: #{tpu_custom_call.1} parent=27 // pred_check_branch
          %591 = sbr.rel (%p589) target = $region48
        $region47: #{tpu_custom_call.1} parent=27 // pred_region
          %s592 = sand.u32 %s42, 1
          %s593 = scalar_lea.sflag [#allocation13], %s592
          %s594 = sand.u32 %s194, 1
          %s595 = smul.addr %s594, 16
          %s596 = scalar_lea.vmem [#allocation12], %s595
          %s598 = ssub.s32 256, 256
          %599 = vsyncadd %s593, %s598
          %s600 = smul.addr %s50, 4
          %s601 = smul.addr %s600, 64
          %s602 = scalar_lea.hbm %s5, %s601
          %s603 = sshll.u32 %s596, 4
          %s604 = int_to_ptr.vmem [resolvable:$true] %s603
          %609 = dma.hbm_to_vmem [thread:$0]  %s602, 256, %s604, %s593, 64, 64, 4
        $region48: #{tpu_custom_call.1} parent=27 // pred_fallthru
          _
        // Predicated region
        $region49: #{tpu_custom_call.1} parent=27 // pred_check
          %p610 = pneg %p230
        $region50: #{tpu_custom_call.1} parent=27 // pred_check_branch
          %612 = sbr.rel (%p610) target = $region52
        $region51: #{tpu_custom_call.1} parent=27 // pred_region
          %s613 = sand.u32 %s42, 1
          %s614 = scalar_lea.sflag [#allocation13], %s613
          %s615 = sand.u32 %s220, 1
          %s616 = scalar_lea.vmem [#allocation14], %s615
          %s618 = ssub.s32 16, 16
          %619 = vsyncadd %s614, %s618
          %s620 = smul.addr %s50, 16
          %s621 = scalar_lea.hbm %s6, %s620
          %s623 = sshll.u32 %s616, 4
          %s624 = int_to_ptr.vmem [resolvable:$true] %s623
          %626 = dma.hbm_to_vmem [thread:$0]  %s621, 16, %s624, %s614
        $region52: #{tpu_custom_call.1} parent=27 // pred_fallthru
          _
        // Predicated region
        $region53: #{tpu_custom_call.1} parent=27 // pred_check
          %p627 = pneg %p256
        $region54: #{tpu_custom_call.1} parent=27 // pred_check_branch
          %629 = sbr.rel (%p627) target = $region56
        $region55: #{tpu_custom_call.1} parent=27 // pred_region
          %s630 = sand.u32 %s42, 1
          %s631 = scalar_lea.sflag [#allocation16], %s630
          %s632 = sand.u32 %s246, 1
          %s633 = scalar_lea.vmem [#allocation15], %s632
          %s635 = ssub.s32 16, 16
          %636 = vsyncadd %s631, %s635
          %s637 = smul.addr %s50, 16
          %s638 = scalar_lea.hbm %s7, %s637
          %s640 = sshll.u32 %s633, 4
          %s641 = int_to_ptr.vmem [resolvable:$true] %s640
          %643 = dma.hbm_to_vmem [thread:$0]  %s638, 16, %s641, %s631
        $region56: #{tpu_custom_call.1} parent=27 // pred_fallthru
          _
        // Predicated region
        $region57: #{tpu_custom_call.1} parent=27 // pred_check
          %p644 = pneg %p282
        $region58: #{tpu_custom_call.1} parent=27 // pred_check_branch
          %646 = sbr.rel (%p644) target = $region60
        $region59: #{tpu_custom_call.1} parent=27 // pred_region
          %s647 = sand.u32 %s42, 1
          %s648 = scalar_lea.sflag [#allocation16], %s647
          %s649 = sand.u32 %s272, 1
          %s650 = scalar_lea.vmem [#allocation17], %s649
          %s652 = ssub.s32 16, 16
          %653 = vsyncadd %s648, %s652
          %s654 = smul.addr %s50, 16
          %s655 = scalar_lea.hbm %s8, %s654
          %s657 = sshll.u32 %s650, 4
          %s658 = int_to_ptr.vmem [resolvable:$true] %s657
          %660 = dma.hbm_to_vmem [thread:$0]  %s655, 16, %s658, %s648
        $region60: #{tpu_custom_call.1} parent=27 // pred_fallthru
          _
        // Predicated region
        $region61: #{tpu_custom_call.1} parent=27 // pred_check
          %p661 = pneg %p308
        $region62: #{tpu_custom_call.1} parent=27 // pred_check_branch
          %663 = sbr.rel (%p661) target = $region64
        $region63: #{tpu_custom_call.1} parent=27 // pred_region
          %s664 = sand.u32 %s42, 1
          %s665 = scalar_lea.sflag [#allocation19], %s664
          %s666 = sand.u32 %s298, 1
          %s667 = smul.addr %s666, 16
          %s668 = scalar_lea.vmem [#allocation18], %s667
          %s670 = ssub.s32 256, 256
          %671 = vsyncadd %s665, %s670
          %s672 = smul.addr %s50, 4
          %s673 = smul.addr %s672, 64
          %s674 = scalar_lea.hbm %s9, %s673
          %s675 = sshll.u32 %s668, 4
          %s676 = int_to_ptr.vmem [resolvable:$true] %s675
          %681 = dma.hbm_to_vmem [thread:$0]  %s674, 256, %s676, %s665, 64, 64, 4
        $region64: #{tpu_custom_call.1} parent=27 // pred_fallthru
          _
        // Predicated region
        $region65: #{tpu_custom_call.1} parent=27 // pred_check
          %p682 = pneg %p334
        $region66: #{tpu_custom_call.1} parent=27 // pred_check_branch
          %684 = sbr.rel (%p682) target = $region68
        $region67: #{tpu_custom_call.1} parent=27 // pred_region
          %s685 = sand.u32 %s42, 1
          %s686 = scalar_lea.sflag [#allocation19], %s685
          %s687 = sand.u32 %s324, 1
          %s688 = scalar_lea.vmem [#allocation20], %s687
          %s690 = ssub.s32 16, 16
          %691 = vsyncadd %s686, %s690
          %s692 = smul.addr %s50, 16
          %s693 = scalar_lea.hbm %s10, %s692
          %s695 = sshll.u32 %s688, 4
          %s696 = int_to_ptr.vmem [resolvable:$true] %s695
          %698 = dma.hbm_to_vmem [thread:$0]  %s693, 16, %s696, %s686
        $region68: #{tpu_custom_call.1} parent=27 // pred_fallthru
          _
        // Predicated region
        $region69: #{tpu_custom_call.1} parent=27 // pred_check
          %p699 = pneg %p360
        $region70: #{tpu_custom_call.1} parent=27 // pred_check_branch
          %701 = sbr.rel (%p699) target = $region72
        $region71: #{tpu_custom_call.1} parent=27 // pred_region
          %s702 = sand.u32 %s42, 1
          %s703 = scalar_lea.sflag [#allocation22], %s702
          %s704 = sand.u32 %s350, 1
          %s705 = smul.addr %s704, 32
          %s706 = scalar_lea.vmem [#allocation21], %s705
          %s708 = ssub.s32 512, 512
          %709 = vsyncadd %s703, %s708
          %s710 = smul.addr %s50, 8
          %s711 = smul.addr %s710, 64
          %s712 = scalar_lea.hbm %s11, %s711
          %s713 = sshll.u32 %s706, 4
          %s714 = int_to_ptr.vmem [resolvable:$true] %s713
          %719 = dma.hbm_to_vmem [thread:$0]  %s712, 512, %s714, %s703, 64, 64, 4
        $region72: #{tpu_custom_call.1} parent=27 // pred_fallthru
          _
        // Predicated region
        $region73: #{tpu_custom_call.1} parent=27 // pred_check
          %p720 = pneg %p386
        $region74: #{tpu_custom_call.1} parent=27 // pred_check_branch
          %722 = sbr.rel (%p720) target = $region76
        $region75: #{tpu_custom_call.1} parent=27 // pred_region
          %s723 = sand.u32 %s42, 1
          %s724 = scalar_lea.sflag [#allocation22], %s723
          %s725 = sand.u32 %s376, 1
          %s726 = scalar_lea.vmem [#allocation23], %s725
          %s728 = ssub.s32 16, 16
          %729 = vsyncadd %s724, %s728
          %s730 = smul.addr %s50, 16
          %s731 = scalar_lea.hbm %s12, %s730
          %s733 = sshll.u32 %s726, 4
          %s734 = int_to_ptr.vmem [resolvable:$true] %s733
          %736 = dma.hbm_to_vmem [thread:$0]  %s731, 16, %s734, %s724
        $region76: #{tpu_custom_call.1} parent=27 // pred_fallthru
          _
      $region28: #{tpu_custom_call.1} parent=5 // pred_fallthru
        _
      %p737 = scmp.le.s32.totalorder 1, %s42
      %p738 = scmp.lt.s32.totalorder %s42, 3
      %p739 = pnand %p737, %p738
      %p740 = pneg %p739
      // Predicated region
      $region77: #{tpu_custom_call.1} parent=5 // pred_check
        _
      $region78: #{tpu_custom_call.1} parent=5 // pred_check_branch
        %742 = sbr.rel (%p739) target = $region80
      $region79: #{tpu_custom_call.1} parent=5 // pred_region
        %s743 = ssub.s32 %s42, 1
        // Predicated region
        $region81: #{tpu_custom_call.1} parent=79 // pred_check
          %p744 = pneg %p80
        $region82: #{tpu_custom_call.1} parent=79 // pred_check_branch
          %746 = sbr.rel (%p744) target = $region84
        $region83: #{tpu_custom_call.1} parent=79 // pred_region
          %747 = dma.done [#allocation4], 256
        $region84: #{tpu_custom_call.1} parent=79 // pred_fallthru
          _
        %s748 = sand.u32 %s47, 1
        %s749 = scalar_lea.sflag [#allocation7], %s748
        %s750 = sand.u32 %s93, 1
        %s751 = scalar_lea.vmem [#allocation6], %s750
        // Predicated region
        $region85: #{tpu_custom_call.1} parent=79 // pred_check
          %p752 = pneg %p106
        $region86: #{tpu_custom_call.1} parent=79 // pred_check_branch
          %754 = sbr.rel (%p752) target = $region88
        $region87: #{tpu_custom_call.1} parent=79 // pred_region
          %755 = dma.done %s749, 16
        $region88: #{tpu_custom_call.1} parent=79 // pred_fallthru
          _
        %s756 = sand.u32 %s47, 1
        %s757 = scalar_lea.sflag [#allocation7], %s756
        %s758 = sand.u32 %s119, 1
        %s759 = scalar_lea.vmem [#allocation8], %s758
        // Predicated region
        $region89: #{tpu_custom_call.1} parent=79 // pred_check
          %p760 = pneg %p132
        $region90: #{tpu_custom_call.1} parent=79 // pred_check_branch
          %762 = sbr.rel (%p760) target = $region92
        $region91: #{tpu_custom_call.1} parent=79 // pred_region
          %763 = dma.done %s757, 16
        $region92: #{tpu_custom_call.1} parent=79 // pred_fallthru
          _
        %s764 = sand.u32 %s47, 1
        %s765 = scalar_lea.sflag [#allocation10], %s764
        %s766 = sand.u32 %s145, 1
        %s767 = smul.addr %s766, 16
        %s768 = scalar_lea.vmem [#allocation9], %s767
        // Predicated region
        $region93: #{tpu_custom_call.1} parent=79 // pred_check
          %p769 = pneg %p158
        $region94: #{tpu_custom_call.1} parent=79 // pred_check_branch
          %771 = sbr.rel (%p769) target = $region96
        $region95: #{tpu_custom_call.1} parent=79 // pred_region
          %772 = dma.done %s765, 256
        $region96: #{tpu_custom_call.1} parent=79 // pred_fallthru
          _
        %s773 = sand.u32 %s47, 1
        %s774 = scalar_lea.sflag [#allocation10], %s773
        %s775 = sand.u32 %s171, 1
        %s776 = scalar_lea.vmem [#allocation11], %s775
        // Predicated region
        $region97: #{tpu_custom_call.1} parent=79 // pred_check
          %p777 = pneg %p184
        $region98: #{tpu_custom_call.1} parent=79 // pred_check_branch
          %779 = sbr.rel (%p777) target = $region100
        $region99: #{tpu_custom_call.1} parent=79 // pred_region
          %780 = dma.done %s774, 16
        $region100: #{tpu_custom_call.1} parent=79 // pred_fallthru
          _
        %s781 = sand.u32 %s47, 1
        %s782 = scalar_lea.sflag [#allocation13], %s781
        %s783 = sand.u32 %s197, 1
        %s784 = smul.addr %s783, 16
        %s785 = scalar_lea.vmem [#allocation12], %s784
        // Predicated region
        $region101: #{tpu_custom_call.1} parent=79 // pred_check
          %p786 = pneg %p210
        $region102: #{tpu_custom_call.1} parent=79 // pred_check_branch
          %788 = sbr.rel (%p786) target = $region104
        $region103: #{tpu_custom_call.1} parent=79 // pred_region
          %789 = dma.done %s782, 256
        $region104: #{tpu_custom_call.1} parent=79 // pred_fallthru
          _
        %s790 = sand.u32 %s47, 1
        %s791 = scalar_lea.sflag [#allocation13], %s790
        %s792 = sand.u32 %s223, 1
        %s793 = scalar_lea.vmem [#allocation14], %s792
        // Predicated region
        $region105: #{tpu_custom_call.1} parent=79 // pred_check
          %p794 = pneg %p236
        $region106: #{tpu_custom_call.1} parent=79 // pred_check_branch
          %796 = sbr.rel (%p794) target = $region108
        $region107: #{tpu_custom_call.1} parent=79 // pred_region
          %797 = dma.done %s791, 16
        $region108: #{tpu_custom_call.1} parent=79 // pred_fallthru
          _
        %s798 = sand.u32 %s47, 1
        %s799 = scalar_lea.sflag [#allocation16], %s798
        %s800 = sand.u32 %s249, 1
        %s801 = scalar_lea.vmem [#allocation15], %s800
        // Predicated region
        $region109: #{tpu_custom_call.1} parent=79 // pred_check
          %p802 = pneg %p262
        $region110: #{tpu_custom_call.1} parent=79 // pred_check_branch
          %804 = sbr.rel (%p802) target = $region112
        $region111: #{tpu_custom_call.1} parent=79 // pred_region
          %805 = dma.done %s799, 16
        $region112: #{tpu_custom_call.1} parent=79 // pred_fallthru
          _
        %s806 = sand.u32 %s47, 1
        %s807 = scalar_lea.sflag [#allocation16], %s806
        %s808 = sand.u32 %s275, 1
        %s809 = scalar_lea.vmem [#allocation17], %s808
        // Predicated region
        $region113: #{tpu_custom_call.1} parent=79 // pred_check
          %p810 = pneg %p288
        $region114: #{tpu_custom_call.1} parent=79 // pred_check_branch
          %812 = sbr.rel (%p810) target = $region116
        $region115: #{tpu_custom_call.1} parent=79 // pred_region
          %813 = dma.done %s807, 16
        $region116: #{tpu_custom_call.1} parent=79 // pred_fallthru
          _
        %s814 = sand.u32 %s47, 1
        %s815 = scalar_lea.sflag [#allocation19], %s814
        %s816 = sand.u32 %s301, 1
        %s817 = smul.addr %s816, 16
        %s818 = scalar_lea.vmem [#allocation18], %s817
        // Predicated region
        $region117: #{tpu_custom_call.1} parent=79 // pred_check
          %p819 = pneg %p314
        $region118: #{tpu_custom_call.1} parent=79 // pred_check_branch
          %821 = sbr.rel (%p819) target = $region120
        $region119: #{tpu_custom_call.1} parent=79 // pred_region
          %822 = dma.done %s815, 256
        $region120: #{tpu_custom_call.1} parent=79 // pred_fallthru
          _
        %s823 = sand.u32 %s47, 1
        %s824 = scalar_lea.sflag [#allocation19], %s823
        %s825 = sand.u32 %s327, 1
        %s826 = scalar_lea.vmem [#allocation20], %s825
        // Predicated region
        $region121: #{tpu_custom_call.1} parent=79 // pred_check
          %p827 = pneg %p340
        $region122: #{tpu_custom_call.1} parent=79 // pred_check_branch
          %829 = sbr.rel (%p827) target = $region124
        $region123: #{tpu_custom_call.1} parent=79 // pred_region
          %830 = dma.done %s824, 16
        $region124: #{tpu_custom_call.1} parent=79 // pred_fallthru
          _
        %s831 = sand.u32 %s47, 1
        %s832 = scalar_lea.sflag [#allocation22], %s831
        %s833 = sand.u32 %s353, 1
        %s834 = smul.addr %s833, 32
        %s835 = scalar_lea.vmem [#allocation21], %s834
        // Predicated region
        $region125: #{tpu_custom_call.1} parent=79 // pred_check
          %p836 = pneg %p366
        $region126: #{tpu_custom_call.1} parent=79 // pred_check_branch
          %838 = sbr.rel (%p836) target = $region128
        $region127: #{tpu_custom_call.1} parent=79 // pred_region
          %839 = dma.done %s832, 512
        $region128: #{tpu_custom_call.1} parent=79 // pred_fallthru
          _
        %s840 = sand.u32 %s47, 1
        %s841 = scalar_lea.sflag [#allocation22], %s840
        %s842 = sand.u32 %s379, 1
        %s843 = scalar_lea.vmem [#allocation23], %s842
        // Predicated region
        $region129: #{tpu_custom_call.1} parent=79 // pred_check
          %p844 = pneg %p392
        $region130: #{tpu_custom_call.1} parent=79 // pred_check_branch
          %846 = sbr.rel (%p844) target = $region132
        $region131: #{tpu_custom_call.1} parent=79 // pred_region
          %847 = dma.done %s841, 16
        $region132: #{tpu_custom_call.1} parent=79 // pred_fallthru
          _
        // Predicated region
        $region133: #{tpu_custom_call.1} parent=79 // pred_check
          %p848 = pneg %p413
        $region134: #{tpu_custom_call.1} parent=79 // pred_check_branch
          %850 = sbr.rel (%p848) target = $region136
        $region135: #{tpu_custom_call.1} parent=79 // pred_region
          %851 = dma.done [#allocation25], 16
        $region136: #{tpu_custom_call.1} parent=79 // pred_fallthru
          _
        // Predicated region
        $region137: #{tpu_custom_call.1} parent=79 // pred_check
          %p852 = pneg %p434
        $region138: #{tpu_custom_call.1} parent=79 // pred_check_branch
          %854 = sbr.rel (%p852) target = $region140
        $region139: #{tpu_custom_call.1} parent=79 // pred_region
          %855 = dma.done [#allocation25], 16
        $region140: #{tpu_custom_call.1} parent=79 // pred_fallthru
          _
        %p856 = pneg %p80
        %p857 = pneg %p77
        %s858 = sand.u32 %s47, 1
        %s859 = scalar_lea.sflag [#allocation7], %s858
        %s860 = sand.u32 %s93, 1
        %s861 = scalar_lea.vmem [#allocation6], %s860
        %p862 = pneg %p106
        %p863 = pneg %p103
        %s864 = sand.u32 %s47, 1
        %s865 = scalar_lea.sflag [#allocation7], %s864
        %s866 = sand.u32 %s119, 1
        %s867 = scalar_lea.vmem [#allocation8], %s866
        %p868 = pneg %p132
        %p869 = pneg %p129
        %s870 = sand.u32 %s47, 1
        %s871 = scalar_lea.sflag [#allocation10], %s870
        %s872 = sand.u32 %s145, 1
        %s873 = smul.addr %s872, 16
        %s874 = scalar_lea.vmem [#allocation9], %s873
        %p875 = pneg %p158
        %p876 = pneg %p155
        %s877 = sand.u32 %s47, 1
        %s878 = scalar_lea.sflag [#allocation10], %s877
        %s879 = sand.u32 %s171, 1
        %s880 = scalar_lea.vmem [#allocation11], %s879
        %p881 = pneg %p184
        %p882 = pneg %p181
        %s883 = sand.u32 %s47, 1
        %s884 = scalar_lea.sflag [#allocation13], %s883
        %s885 = sand.u32 %s197, 1
        %s886 = smul.addr %s885, 16
        %s887 = scalar_lea.vmem [#allocation12], %s886
        %p888 = pneg %p210
        %p889 = pneg %p207
        %s890 = sand.u32 %s47, 1
        %s891 = scalar_lea.sflag [#allocation13], %s890
        %s892 = sand.u32 %s223, 1
        %s893 = scalar_lea.vmem [#allocation14], %s892
        %p894 = pneg %p236
        %p895 = pneg %p233
        %s896 = sand.u32 %s47, 1
        %s897 = scalar_lea.sflag [#allocation16], %s896
        %s898 = sand.u32 %s249, 1
        %s899 = scalar_lea.vmem [#allocation15], %s898
        %p900 = pneg %p262
        %p901 = pneg %p259
        %s902 = sand.u32 %s47, 1
        %s903 = scalar_lea.sflag [#allocation16], %s902
        %s904 = sand.u32 %s275, 1
        %s905 = scalar_lea.vmem [#allocation17], %s904
        %p906 = pneg %p288
        %p907 = pneg %p285
        %s908 = sand.u32 %s47, 1
        %s909 = scalar_lea.sflag [#allocation19], %s908
        %s910 = sand.u32 %s301, 1
        %s911 = smul.addr %s910, 16
        %s912 = scalar_lea.vmem [#allocation18], %s911
        %p913 = pneg %p314
        %p914 = pneg %p311
        %s915 = sand.u32 %s47, 1
        %s916 = scalar_lea.sflag [#allocation19], %s915
        %s917 = sand.u32 %s327, 1
        %s918 = scalar_lea.vmem [#allocation20], %s917
        %p919 = pneg %p340
        %p920 = pneg %p337
        %s921 = sand.u32 %s47, 1
        %s922 = scalar_lea.sflag [#allocation22], %s921
        %s923 = sand.u32 %s353, 1
        %s924 = smul.addr %s923, 32
        %s925 = scalar_lea.vmem [#allocation21], %s924
        %p926 = pneg %p366
        %p927 = pneg %p363
        %s928 = sand.u32 %s47, 1
        %s929 = scalar_lea.sflag [#allocation22], %s928
        %s930 = sand.u32 %s379, 1
        %s931 = scalar_lea.vmem [#allocation23], %s930
        %p932 = pneg %p392
        %p933 = pneg %p389
        %p934 = pneg %p413
        %p935 = pneg %p410
        %p936 = pneg %p434
        %p937 = pneg %p431
        %p938 = pneg %p460
        %p939 = pneg %p457
        %s940 = smul.u32 2, %s51
        %s941 = smul.u32 2, %s51
        %p943 = scmp.eq.s32.totalorder %s52, 0
        // Predicated region
        $region141: #{tpu_custom_call.1} parent=79 // pred_check
          %p944 = pneg %p943
        $region142: #{tpu_custom_call.1} parent=79 // pred_check_branch
          %946 = sbr.rel (%p944) target = $region144
        $region143: #{tpu_custom_call.1} parent=79 // pred_region
          %v947 = vld [vmem:[#allocation3] sm:$0xff]
          %vm948 = vcmask 261120
          %949 = vst.msk [vmem:[#allocation2] sm:$0xff] %vm948, %v947
          %s950 = scalar_lea.vmem [#allocation3], 8
          %v951 = vld [vmem:[%s950] sm:$0xff]
          %952 = vst.msk [vmem:[#allocation2 + $0x8] sm:$0xff] %vm948, %v951
        $region144: #{tpu_custom_call.1} parent=79 // pred_fallthru
          _
        %v953 = vld [vmem:[#allocation2] sm:$0xff]
        %v954 = vld [vmem:[#allocation2 + $0x8] sm:$0xff]
        %v955 = vld [vmem:[%s751] sm:$0x1]
        %v956 = vld [vmem:[%s759] sm:$0x1]
        %vm957 = vcmask 261120
        %v958 = vsel %vm957, %v953, 0.0
        %959 = vadd.xlane.f32.xlu0 %v958
        %v960 = vpop.xlane.xlu0 %959
        %v961 = vsel %vm957, %v954, 0.0
        %962 = vadd.xlane.f32.xlu0 %v961
        %v963 = vpop.xlane.xlu0 %962
        %v964 = vrcp.pop 32.0
        %v965 = vmul.f32 %v960, %v964
        %v966 = vmul.f32 %v963, %v964
        %v967 = vsub.f32 %v953, %v965
        %v968 = vsub.f32 %v954, %v966
        %v969 = vmul.f32 %v967, %v967
        %v970 = vmul.f32 %v968, %v968
        %v971 = vsel %vm957, %v969, 0.0
        %972 = vadd.xlane.f32.xlu0 %v971
        %v973 = vpop.xlane.xlu0 %972
        %v974 = vsel %vm957, %v970, 0.0
        %975 = vadd.xlane.f32.xlu0 %v974
        %v976 = vpop.xlane.xlu0 %975
        %v977 = vmul.f32 %v973, 0.032258064
        %v978 = vmul.f32 %v976, 0.032258064
        %v979 = vrsqrt.pop %v977
        %v980 = vmul.f32 %v977, %v979
        %vm981 = vcmp.eq.f32.partialorder %v977, inf
        %v982 = vsel %vm981, %v977, %v980
        %vm983 = vcmp.eq.f32.partialorder %v977, 0.0
        %v984 = vand.u32 %v977, 2147483648
        %v985 = vsel %vm983, %v984, %v982
        %v986 = vrsqrt.pop %v978
        %v987 = vmul.f32 %v978, %v986
        %vm988 = vcmp.eq.f32.partialorder %v978, inf
        %v989 = vsel %vm988, %v978, %v987
        %vm990 = vcmp.eq.f32.partialorder %v978, 0.0
        %v991 = vand.u32 %v978, 2147483648
        %v992 = vsel %vm990, %v991, %v989
        %v993 = vadd.f32 %v985, 1e-06
        %v994 = vadd.f32 %v992, 1e-06
        %v995 = vrcp.pop %v993
        %v996 = vrcp.pop %v994
        %v998 = vlaneseq
        %v999 = vshrl.u32 %v998, 7
        %v1000 = vsub.s32 0, %v999
        %v1001 = vrot.slane %v955, %v1000
        %v1003 = vmul.f32 %v1001, %v967
        %v1004 = vmul.f32 %v1001, %v968
        %v1005 = vmul.f32 %v1003, %v995
        %v1006 = vmul.f32 %v1004, %v996
        %v1008 = vlaneseq
        %v1009 = vshrl.u32 %v1008, 7
        %v1010 = vsub.s32 0, %v1009
        %v1011 = vrot.slane %v956, %v1010
        %v1013 = vadd.f32 %v1005, %v1011
        %v1014 = vadd.f32 %v1006, %v1011
        %v1015 = vpack.c.bf16 %v1014, %v1013
        %v1016 = vld [vmem:[%s768] sm:$0xf]
        %v1017 = vld [vmem:[%s768 + $0x4] sm:$0xf]
        %v1018 = vld [vmem:[%s768 + $0x8] sm:$0xf]
        %v1019 = vld [vmem:[%s768 + $0xc] sm:$0xf]
        %v1020 = vld [vmem:[%s776] sm:$0x1]
        %v1022 = vlaneseq
        %v1023 = vshrl.u32 %v1022, 7
        %v1024 = vsub.s32 0, %v1023
        %v1025 = vrot.slane %v1020, %v1024
        %v1031 = vunpack.c.l.b16 %v1016
        %v1032 = vunpack.c.l.b16 %v1017
        %v1033 = vunpack.c.l.b16 %v1018
        %v1034 = vunpack.c.l.b16 %v1019
        %v1035 = vpack.c.b16 %v1032, %v1031
        %v1036 = vpack.c.b16 %v1034, %v1033
        %v1040 = vsel %vm957, %v1015, 0
        %1042 = vmatprep.subr.bf16.mxu0 0
        %1043 = vmatpush1.bf16.msra.mxu0 %v1035
        %1044 = vmatprep.subr.bf16.mxu0 0
        %1045 = vmatpush1.bf16.msra.mxu0 %v1036
        %1046 = vmatprep.subr.bf16.mxu0 0
        %1047 = vmatpush1.bf16.msra.mxu0 0
        %1048 = vmatprep.subr.bf16.mxu0 0
        %1049 = vmatpush1.bf16.msra.mxu0 0
        %1050 = vmatprep.subr.bf16.mxu0 0
        %1051 = vmatpush1.bf16.msra.mxu0 0
        %1052 = vmatprep.subr.bf16.mxu0 0
        %1053 = vmatpush1.bf16.msra.mxu0 0
        %1054 = vmatprep.subr.bf16.mxu0 0
        %1055 = vmatpush1.bf16.msra.mxu0 0
        %1056 = vmatprep.subr.bf16.mxu0 0
        %1057 = vmatpush1.bf16.msra.mxu0 0
        %1058 = vmatprep.subr.bf16.mxu0 0
        %1059 = vmatpush1.bf16.msra.mxu0 0
        %1060 = vmatprep.subr.bf16.mxu0 0
        %1061 = vmatpush1.bf16.msra.mxu0 0
        %1062 = vmatprep.subr.bf16.mxu0 0
        %1063 = vmatpush1.bf16.msra.mxu0 0
        %1064 = vmatprep.subr.bf16.mxu0 0
        %1065 = vmatpush1.bf16.msra.mxu0 0
        %1066 = vmatprep.subr.bf16.mxu0 0
        %1067 = vmatpush1.bf16.msra.mxu0 0
        %1068 = vmatprep.subr.bf16.mxu0 0
        %1069 = vmatpush1.bf16.msra.mxu0 0
        %1070 = vmatprep.subr.bf16.mxu0 0
        %1071 = vmatpush1.bf16.msra.mxu0 0
        %1072 = vmatprep.subr.bf16.mxu0 0
        %1073 = vmatpush1.bf16.msra.mxu0 0
        %1074 = vmatprep.mubr.bf16.mxu0 0
        %1075 = vmatmul.mubr.bf16.gmra.mrb[0].mxu0 %v1040
        %v1076 = vpop.f32.mrb[0].mxu0
        %v1077 = vadd.f32 %v1025, %v1076
        %v1078 = vpop.f32.mrb[0].mxu0
        %v1079 = vpop.f32.mrb[0].mxu0
        %v1080 = vadd.f32 %v1025, %v1079
        %v1081 = vpop.f32.mrb[0].mxu0
        %1082 = vdwg.mxu0
        %1084 = vrot.lane.b32.xlu0 %v1077, 120
        %v1085 = vpop.permute.xlu0 %1084
        %1088 = vrot.lane.b32.xlu0 %v1080, 120
        %v1089 = vpop.permute.xlu0 %1088
        %1091 = vrot.lane.b32.xlu0 %v1077, 112
        %v1092 = vpop.permute.xlu0 %1091
        %1094 = vrot.lane.b32.xlu0 %v1080, 112
        %v1095 = vpop.permute.xlu0 %1094
        %1097 = vrot.lane.b32.xlu0 %v1077, 104
        %v1098 = vpop.permute.xlu0 %1097
        %1100 = vrot.lane.b32.xlu0 %v1080, 104
        %v1101 = vpop.permute.xlu0 %1100
        %v1103 = vpack.c.bf16 %v1077, %v1077
        %v1104 = vpack.c.bf16 %v1080, %v1080
        %v1105 = vpack.c.bf16 %v1085, %v1085
        %v1106 = vpack.c.bf16 %v1089, %v1089
        %v1107 = vpack.c.bf16 %v1092, %v1092
        %v1108 = vpack.c.bf16 %v1095, %v1095
        %v1109 = vpack.c.bf16 %v1098, %v1098
        %v1110 = vpack.c.bf16 %v1101, %v1101
        %1112 = vrot.lane.b32.xlu0 %v1103, 96
        %v1113 = vpop.permute.xlu0 %1112
        %vm1114 = vcmask 64512
        %v1116 = vsel %vm1114, %v1103, 0
        %v1119 = vsel %vm1114, %v1113, 0
        %1121 = vmatprep.subr.bf16.mxu0 0
        %1122 = vmatpush1.bf16.xpose.msra.mxu0 %v1119
        %1123 = vmatprep.subr.bf16.mxu0 0
        %1124 = vmatpush1.bf16.xpose.msra.mxu0 0
        %1125 = vmatprep.subr.bf16.mxu0 0
        %1126 = vmatpush1.bf16.xpose.msra.mxu0 0
        %1127 = vmatprep.subr.bf16.mxu0 0
        %1128 = vmatpush1.bf16.xpose.msra.mxu0 0
        %1129 = vmatprep.subr.bf16.mxu0 0
        %1130 = vmatpush1.bf16.xpose.msra.mxu0 0
        %1131 = vmatprep.subr.bf16.mxu0 0
        %1132 = vmatpush1.bf16.xpose.msra.mxu0 0
        %1133 = vmatprep.subr.bf16.mxu0 0
        %1134 = vmatpush1.bf16.xpose.msra.mxu0 0
        %1135 = vmatprep.subr.bf16.mxu0 0
        %1136 = vmatpush1.bf16.xpose.msra.mxu0 0
        %1137 = vmatprep.subr.bf16.mxu0 0
        %1138 = vmatpush1.bf16.xpose.msra.mxu0 0
        %1139 = vmatprep.subr.bf16.mxu0 0
        %1140 = vmatpush1.bf16.xpose.msra.mxu0 0
        %1141 = vmatprep.subr.bf16.mxu0 0
        %1142 = vmatpush1.bf16.xpose.msra.mxu0 0
        %1143 = vmatprep.subr.bf16.mxu0 0
        %1144 = vmatpush1.bf16.xpose.msra.mxu0 0
        %1145 = vmatprep.subr.bf16.mxu0 0
        %1146 = vmatpush1.bf16.xpose.msra.mxu0 0
        %1147 = vmatprep.subr.bf16.mxu0 0
        %1148 = vmatpush1.bf16.xpose.msra.mxu0 0
        %1149 = vmatprep.subr.bf16.mxu0 0
        %1150 = vmatpush1.bf16.xpose.msra.mxu0 0
        %1151 = vmatprep.subr.bf16.mxu0 0
        %1152 = vmatpush1.bf16.xpose.msra.mxu0 0
        %1153 = vmatprep.mubr.bf16.mxu0 0
        %1154 = vmatmul.mubr.bf16.gmra.mrb[0].mxu0 %v1116
        %v1155 = vpop.f32.mrb[0].mxu0
        %v1156 = vadd.f32 0.0, %v1155
        %v1157 = vpop.f32.mrb[0].mxu0
        %v1158 = vpop.f32.mrb[0].mxu0
        %v1159 = vpop.f32.mrb[0].mxu0
        %1160 = vdwg.mxu0
        %1162 = vrot.lane.b32.xlu0 %v1104, 96
        %v1163 = vpop.permute.xlu0 %1162
        %v1165 = vsel %vm1114, %v1104, 0
        %v1168 = vsel %vm1114, %v1163, 0
        %1170 = vmatprep.subr.bf16.mxu0 0
        %1171 = vmatpush1.bf16.xpose.msra.mxu0 %v1168
        %1172 = vmatprep.subr.bf16.mxu0 0
        %1173 = vmatpush1.bf16.xpose.msra.mxu0 0
        %1174 = vmatprep.subr.bf16.mxu0 0
        %1175 = vmatpush1.bf16.xpose.msra.mxu0 0
        %1176 = vmatprep.subr.bf16.mxu0 0
        %1177 = vmatpush1.bf16.xpose.msra.mxu0 0
        %1178 = vmatprep.subr.bf16.mxu0 0
        %1179 = vmatpush1.bf16.xpose.msra.mxu0 0
        %1180 = vmatprep.subr.bf16.mxu0 0
        %1181 = vmatpush1.bf16.xpose.msra.mxu0 0
        %1182 = vmatprep.subr.bf16.mxu0 0
        %1183 = vmatpush1.bf16.xpose.msra.mxu0 0
        %1184 = vmatprep.subr.bf16.mxu0 0
        %1185 = vmatpush1.bf16.xpose.msra.mxu0 0
        %1186 = vmatprep.subr.bf16.mxu0 0
        %1187 = vmatpush1.bf16.xpose.msra.mxu0 0
        %1188 = vmatprep.subr.bf16.mxu0 0
        %1189 = vmatpush1.bf16.xpose.msra.mxu0 0
        %1190 = vmatprep.subr.bf16.mxu0 0
        %1191 = vmatpush1.bf16.xpose.msra.mxu0 0
        %1192 = vmatprep.subr.bf16.mxu0 0
        %1193 = vmatpush1.bf16.xpose.msra.mxu0 0
        %1194 = vmatprep.subr.bf16.mxu0 0
        %1195 = vmatpush1.bf16.xpose.msra.mxu0 0
        %1196 = vmatprep.subr.bf16.mxu0 0
        %1197 = vmatpush1.bf16.xpose.msra.mxu0 0
        %1198 = vmatprep.subr.bf16.mxu0 0
        %1199 = vmatpush1.bf16.xpose.msra.mxu0 0
        %1200 = vmatprep.subr.bf16.mxu0 0
        %1201 = vmatpush1.bf16.xpose.msra.mxu0 0
        %1202 = vmatprep.mubr.bf16.mxu0 0
        %1203 = vmatmul.mubr.bf16.gmra.mrb[0].mxu0 %v1165
        %v1204 = vpop.f32.mrb[0].mxu0
        %v1205 = vadd.f32 0.0, %v1204
        %v1206 = vpop.f32.mrb[0].mxu0
        %v1207 = vpop.f32.mrb[0].mxu0
        %v1208 = vpop.f32.mrb[0].mxu0
        %1209 = vdwg.mxu0
        %1211 = vrot.lane.b32.xlu0 %v1105, 96
        %v1212 = vpop.permute.xlu0 %1211
        %v1214 = vsel %vm1114, %v1105, 0
        %v1217 = vsel %vm1114, %v1212, 0
        %1219 = vmatprep.subr.bf16.mxu0 0
        %1220 = vmatpush1.bf16.xpose.msra.mxu0 %v1217
        %1221 = vmatprep.subr.bf16.mxu0 0
        %1222 = vmatpush1.bf16.xpose.msra.mxu0 0
        %1223 = vmatprep.subr.bf16.mxu0 0
        %1224 = vmatpush1.bf16.xpose.msra.mxu0 0
        %1225 = vmatprep.subr.bf16.mxu0 0
        %1226 = vmatpush1.bf16.xpose.msra.mxu0 0
        %1227 = vmatprep.subr.bf16.mxu0 0
        %1228 = vmatpush1.bf16.xpose.msra.mxu0 0
        %1229 = vmatprep.subr.bf16.mxu0 0
        %1230 = vmatpush1.bf16.xpose.msra.mxu0 0
        %1231 = vmatprep.subr.bf16.mxu0 0
        %1232 = vmatpush1.bf16.xpose.msra.mxu0 0
        %1233 = vmatprep.subr.bf16.mxu0 0
        %1234 = vmatpush1.bf16.xpose.msra.mxu0 0
        %1235 = vmatprep.subr.bf16.mxu0 0
        %1236 = vmatpush1.bf16.xpose.msra.mxu0 0
        %1237 = vmatprep.subr.bf16.mxu0 0
        %1238 = vmatpush1.bf16.xpose.msra.mxu0 0
        %1239 = vmatprep.subr.bf16.mxu0 0
        %1240 = vmatpush1.bf16.xpose.msra.mxu0 0
        %1241 = vmatprep.subr.bf16.mxu0 0
        %1242 = vmatpush1.bf16.xpose.msra.mxu0 0
        %1243 = vmatprep.subr.bf16.mxu0 0
        %1244 = vmatpush1.bf16.xpose.msra.mxu0 0
        %1245 = vmatprep.subr.bf16.mxu0 0
        %1246 = vmatpush1.bf16.xpose.msra.mxu0 0
        %1247 = vmatprep.subr.bf16.mxu0 0
        %1248 = vmatpush1.bf16.xpose.msra.mxu0 0
        %1249 = vmatprep.subr.bf16.mxu0 0
        %1250 = vmatpush1.bf16.xpose.msra.mxu0 0
        %1251 = vmatprep.mubr.bf16.mxu0 0
        %1252 = vmatmul.mubr.bf16.gmra.mrb[0].mxu0 %v1214
        %v1253 = vpop.f32.mrb[0].mxu0
        %v1254 = vadd.f32 0.0, %v1253
        %v1255 = vpop.f32.mrb[0].mxu0
        %v1256 = vpop.f32.mrb[0].mxu0
        %v1257 = vpop.f32.mrb[0].mxu0
        %1258 = vdwg.mxu0
        %1260 = vrot.lane.b32.xlu0 %v1106, 96
        %v1261 = vpop.permute.xlu0 %1260
        %v1263 = vsel %vm1114, %v1106, 0
        %v1266 = vsel %vm1114, %v1261, 0
        %1268 = vmatprep.subr.bf16.mxu0 0
        %1269 = vmatpush1.bf16.xpose.msra.mxu0 %v1266
        %1270 = vmatprep.subr.bf16.mxu0 0
        %1271 = vmatpush1.bf16.xpose.msra.mxu0 0
        %1272 = vmatprep.subr.bf16.mxu0 0
        %1273 = vmatpush1.bf16.xpose.msra.mxu0 0
        %1274 = vmatprep.subr.bf16.mxu0 0
        %1275 = vmatpush1.bf16.xpose.msra.mxu0 0
        %1276 = vmatprep.subr.bf16.mxu0 0
        %1277 = vmatpush1.bf16.xpose.msra.mxu0 0
        %1278 = vmatprep.subr.bf16.mxu0 0
        %1279 = vmatpush1.bf16.xpose.msra.mxu0 0
        %1280 = vmatprep.subr.bf16.mxu0 0
        %1281 = vmatpush1.bf16.xpose.msra.mxu0 0
        %1282 = vmatprep.subr.bf16.mxu0 0
        %1283 = vmatpush1.bf16.xpose.msra.mxu0 0
        %1284 = vmatprep.subr.bf16.mxu0 0
        %1285 = vmatpush1.bf16.xpose.msra.mxu0 0
        %1286 = vmatprep.subr.bf16.mxu0 0
        %1287 = vmatpush1.bf16.xpose.msra.mxu0 0
        %1288 = vmatprep.subr.bf16.mxu0 0
        %1289 = vmatpush1.bf16.xpose.msra.mxu0 0
        %1290 = vmatprep.subr.bf16.mxu0 0
        %1291 = vmatpush1.bf16.xpose.msra.mxu0 0
        %1292 = vmatprep.subr.bf16.mxu0 0
        %1293 = vmatpush1.bf16.xpose.msra.mxu0 0
        %1294 = vmatprep.subr.bf16.mxu0 0
        %1295 = vmatpush1.bf16.xpose.msra.mxu0 0
        %1296 = vmatprep.subr.bf16.mxu0 0
        %1297 = vmatpush1.bf16.xpose.msra.mxu0 0
        %1298 = vmatprep.subr.bf16.mxu0 0
        %1299 = vmatpush1.bf16.xpose.msra.mxu0 0
        %1300 = vmatprep.mubr.bf16.mxu0 0
        %1301 = vmatmul.mubr.bf16.gmra.mrb[0].mxu0 %v1263
        %v1302 = vpop.f32.mrb[0].mxu0
        %v1303 = vadd.f32 0.0, %v1302
        %v1304 = vpop.f32.mrb[0].mxu0
        %v1305 = vpop.f32.mrb[0].mxu0
        %v1306 = vpop.f32.mrb[0].mxu0
        %1307 = vdwg.mxu0
        %1309 = vrot.lane.b32.xlu0 %v1107, 96
        %v1310 = vpop.permute.xlu0 %1309
        %v1312 = vsel %vm1114, %v1107, 0
        %v1315 = vsel %vm1114, %v1310, 0
        %1317 = vmatprep.subr.bf16.mxu0 0
        %1318 = vmatpush1.bf16.xpose.msra.mxu0 %v1315
        %1319 = vmatprep.subr.bf16.mxu0 0
        %1320 = vmatpush1.bf16.xpose.msra.mxu0 0
        %1321 = vmatprep.subr.bf16.mxu0 0
        %1322 = vmatpush1.bf16.xpose.msra.mxu0 0
        %1323 = vmatprep.subr.bf16.mxu0 0
        %1324 = vmatpush1.bf16.xpose.msra.mxu0 0
        %1325 = vmatprep.subr.bf16.mxu0 0
        %1326 = vmatpush1.bf16.xpose.msra.mxu0 0
        %1327 = vmatprep.subr.bf16.mxu0 0
        %1328 = vmatpush1.bf16.xpose.msra.mxu0 0
        %1329 = vmatprep.subr.bf16.mxu0 0
        %1330 = vmatpush1.bf16.xpose.msra.mxu0 0
        %1331 = vmatprep.subr.bf16.mxu0 0
        %1332 = vmatpush1.bf16.xpose.msra.mxu0 0
        %1333 = vmatprep.subr.bf16.mxu0 0
        %1334 = vmatpush1.bf16.xpose.msra.mxu0 0
        %1335 = vmatprep.subr.bf16.mxu0 0
        %1336 = vmatpush1.bf16.xpose.msra.mxu0 0
        %1337 = vmatprep.subr.bf16.mxu0 0
        %1338 = vmatpush1.bf16.xpose.msra.mxu0 0
        %1339 = vmatprep.subr.bf16.mxu0 0
        %1340 = vmatpush1.bf16.xpose.msra.mxu0 0
        %1341 = vmatprep.subr.bf16.mxu0 0
        %1342 = vmatpush1.bf16.xpose.msra.mxu0 0
        %1343 = vmatprep.subr.bf16.mxu0 0
        %1344 = vmatpush1.bf16.xpose.msra.mxu0 0
        %1345 = vmatprep.subr.bf16.mxu0 0
        %1346 = vmatpush1.bf16.xpose.msra.mxu0 0
        %1347 = vmatprep.subr.bf16.mxu0 0
        %1348 = vmatpush1.bf16.xpose.msra.mxu0 0
        %1349 = vmatprep.mubr.bf16.mxu0 0
        %1350 = vmatmul.mubr.bf16.gmra.mrb[0].mxu0 %v1312
        %v1351 = vpop.f32.mrb[0].mxu0
        %v1352 = vadd.f32 0.0, %v1351
        %v1353 = vpop.f32.mrb[0].mxu0
        %v1354 = vpop.f32.mrb[0].mxu0
        %v1355 = vpop.f32.mrb[0].mxu0
        %1356 = vdwg.mxu0
        %1358 = vrot.lane.b32.xlu0 %v1108, 96
        %v1359 = vpop.permute.xlu0 %1358
        %v1361 = vsel %vm1114, %v1108, 0
        %v1364 = vsel %vm1114, %v1359, 0
        %1366 = vmatprep.subr.bf16.mxu0 0
        %1367 = vmatpush1.bf16.xpose.msra.mxu0 %v1364
        %1368 = vmatprep.subr.bf16.mxu0 0
        %1369 = vmatpush1.bf16.xpose.msra.mxu0 0
        %1370 = vmatprep.subr.bf16.mxu0 0
        %1371 = vmatpush1.bf16.xpose.msra.mxu0 0
        %1372 = vmatprep.subr.bf16.mxu0 0
        %1373 = vmatpush1.bf16.xpose.msra.mxu0 0
        %1374 = vmatprep.subr.bf16.mxu0 0
        %1375 = vmatpush1.bf16.xpose.msra.mxu0 0
        %1376 = vmatprep.subr.bf16.mxu0 0
        %1377 = vmatpush1.bf16.xpose.msra.mxu0 0
        %1378 = vmatprep.subr.bf16.mxu0 0
        %1379 = vmatpush1.bf16.xpose.msra.mxu0 0
        %1380 = vmatprep.subr.bf16.mxu0 0
        %1381 = vmatpush1.bf16.xpose.msra.mxu0 0
        %1382 = vmatprep.subr.bf16.mxu0 0
        %1383 = vmatpush1.bf16.xpose.msra.mxu0 0
        %1384 = vmatprep.subr.bf16.mxu0 0
        %1385 = vmatpush1.bf16.xpose.msra.mxu0 0
        %1386 = vmatprep.subr.bf16.mxu0 0
        %1387 = vmatpush1.bf16.xpose.msra.mxu0 0
        %1388 = vmatprep.subr.bf16.mxu0 0
        %1389 = vmatpush1.bf16.xpose.msra.mxu0 0
        %1390 = vmatprep.subr.bf16.mxu0 0
        %1391 = vmatpush1.bf16.xpose.msra.mxu0 0
        %1392 = vmatprep.subr.bf16.mxu0 0
        %1393 = vmatpush1.bf16.xpose.msra.mxu0 0
        %1394 = vmatprep.subr.bf16.mxu0 0
        %1395 = vmatpush1.bf16.xpose.msra.mxu0 0
        %1396 = vmatprep.subr.bf16.mxu0 0
        %1397 = vmatpush1.bf16.xpose.msra.mxu0 0
        %1398 = vmatprep.mubr.bf16.mxu0 0
        %1399 = vmatmul.mubr.bf16.gmra.mrb[0].mxu0 %v1361
        %v1400 = vpop.f32.mrb[0].mxu0
        %v1401 = vadd.f32 0.0, %v1400
        %v1402 = vpop.f32.mrb[0].mxu0
        %v1403 = vpop.f32.mrb[0].mxu0
        %v1404 = vpop.f32.mrb[0].mxu0
        %1405 = vdwg.mxu0
        %1407 = vrot.lane.b32.xlu0 %v1109, 96
        %v1408 = vpop.permute.xlu0 %1407
        %v1410 = vsel %vm1114, %v1109, 0
        %v1413 = vsel %vm1114, %v1408, 0
        %1415 = vmatprep.subr.bf16.mxu0 0
        %1416 = vmatpush1.bf16.xpose.msra.mxu0 %v1413
        %1417 = vmatprep.subr.bf16.mxu0 0
        %1418 = vmatpush1.bf16.xpose.msra.mxu0 0
        %1419 = vmatprep.subr.bf16.mxu0 0
        %1420 = vmatpush1.bf16.xpose.msra.mxu0 0
        %1421 = vmatprep.subr.bf16.mxu0 0
        %1422 = vmatpush1.bf16.xpose.msra.mxu0 0
        %1423 = vmatprep.subr.bf16.mxu0 0
        %1424 = vmatpush1.bf16.xpose.msra.mxu0 0
        %1425 = vmatprep.subr.bf16.mxu0 0
        %1426 = vmatpush1.bf16.xpose.msra.mxu0 0
        %1427 = vmatprep.subr.bf16.mxu0 0
        %1428 = vmatpush1.bf16.xpose.msra.mxu0 0
        %1429 = vmatprep.subr.bf16.mxu0 0
        %1430 = vmatpush1.bf16.xpose.msra.mxu0 0
        %1431 = vmatprep.subr.bf16.mxu0 0
        %1432 = vmatpush1.bf16.xpose.msra.mxu0 0
        %1433 = vmatprep.subr.bf16.mxu0 0
        %1434 = vmatpush1.bf16.xpose.msra.mxu0 0
        %1435 = vmatprep.subr.bf16.mxu0 0
        %1436 = vmatpush1.bf16.xpose.msra.mxu0 0
        %1437 = vmatprep.subr.bf16.mxu0 0
        %1438 = vmatpush1.bf16.xpose.msra.mxu0 0
        %1439 = vmatprep.subr.bf16.mxu0 0
        %1440 = vmatpush1.bf16.xpose.msra.mxu0 0
        %1441 = vmatprep.subr.bf16.mxu0 0
        %1442 = vmatpush1.bf16.xpose.msra.mxu0 0
        %1443 = vmatprep.subr.bf16.mxu0 0
        %1444 = vmatpush1.bf16.xpose.msra.mxu0 0
        %1445 = vmatprep.subr.bf16.mxu0 0
        %1446 = vmatpush1.bf16.xpose.msra.mxu0 0
        %1447 = vmatprep.mubr.bf16.mxu0 0
        %1448 = vmatmul.mubr.bf16.gmra.mrb[0].mxu0 %v1410
        %v1449 = vpop.f32.mrb[0].mxu0
        %v1450 = vadd.f32 0.0, %v1449
        %v1451 = vpop.f32.mrb[0].mxu0
        %v1452 = vpop.f32.mrb[0].mxu0
        %v1453 = vpop.f32.mrb[0].mxu0
        %1454 = vdwg.mxu0
        %1456 = vrot.lane.b32.xlu0 %v1110, 96
        %v1457 = vpop.permute.xlu0 %1456
        %v1459 = vsel %vm1114, %v1110, 0
        %v1462 = vsel %vm1114, %v1457, 0
        %1464 = vmatprep.subr.bf16.mxu0 0
        %1465 = vmatpush1.bf16.xpose.msra.mxu0 %v1462
        %1466 = vmatprep.subr.bf16.mxu0 0
        %1467 = vmatpush1.bf16.xpose.msra.mxu0 0
        %1468 = vmatprep.subr.bf16.mxu0 0
        %1469 = vmatpush1.bf16.xpose.msra.mxu0 0
        %1470 = vmatprep.subr.bf16.mxu0 0
        %1471 = vmatpush1.bf16.xpose.msra.mxu0 0
        %1472 = vmatprep.subr.bf16.mxu0 0
        %1473 = vmatpush1.bf16.xpose.msra.mxu0 0
        %1474 = vmatprep.subr.bf16.mxu0 0
        %1475 = vmatpush1.bf16.xpose.msra.mxu0 0
        %1476 = vmatprep.subr.bf16.mxu0 0
        %1477 = vmatpush1.bf16.xpose.msra.mxu0 0
        %1478 = vmatprep.subr.bf16.mxu0 0
        %1479 = vmatpush1.bf16.xpose.msra.mxu0 0
        %1480 = vmatprep.subr.bf16.mxu0 0
        %1481 = vmatpush1.bf16.xpose.msra.mxu0 0
        %1482 = vmatprep.subr.bf16.mxu0 0
        %1483 = vmatpush1.bf16.xpose.msra.mxu0 0
        %1484 = vmatprep.subr.bf16.mxu0 0
        %1485 = vmatpush1.bf16.xpose.msra.mxu0 0
        %1486 = vmatprep.subr.bf16.mxu0 0
        %1487 = vmatpush1.bf16.xpose.msra.mxu0 0
        %1488 = vmatprep.subr.bf16.mxu0 0
        %1489 = vmatpush1.bf16.xpose.msra.mxu0 0
        %1490 = vmatprep.subr.bf16.mxu0 0
        %1491 = vmatpush1.bf16.xpose.msra.mxu0 0
        %1492 = vmatprep.subr.bf16.mxu0 0
        %1493 = vmatpush1.bf16.xpose.msra.mxu0 0
        %1494 = vmatprep.subr.bf16.mxu0 0
        %1495 = vmatpush1.bf16.xpose.msra.mxu0 0
        %1496 = vmatprep.mubr.bf16.mxu0 0
        %1497 = vmatmul.mubr.bf16.gmra.mrb[0].mxu0 %v1459
        %v1498 = vpop.f32.mrb[0].mxu0
        %v1499 = vadd.f32 0.0, %v1498
        %v1500 = vpop.f32.mrb[0].mxu0
        %v1501 = vpop.f32.mrb[0].mxu0
        %v1502 = vpop.f32.mrb[0].mxu0
        %1503 = vdwg.mxu0
        %v1504 = vsel %vm1114, %v1156, -inf
        %1505 = vmax.xlane.f32.xlu0 %v1504
        %v1506 = vpop.xlane.xlu0 %1505
        %v1507 = vsel %vm1114, %v1205, -inf
        %1508 = vmax.xlane.f32.xlu0 %v1507
        %v1509 = vpop.xlane.xlu0 %1508
        %v1510 = vsel %vm1114, %v1254, -inf
        %1511 = vmax.xlane.f32.xlu0 %v1510
        %v1512 = vpop.xlane.xlu0 %1511
        %v1513 = vsel %vm1114, %v1303, -inf
        %1514 = vmax.xlane.f32.xlu0 %v1513
        %v1515 = vpop.xlane.xlu0 %1514
        %v1516 = vsel %vm1114, %v1352, -inf
        %1517 = vmax.xlane.f32.xlu0 %v1516
        %v1518 = vpop.xlane.xlu0 %1517
        %v1519 = vsel %vm1114, %v1401, -inf
        %1520 = vmax.xlane.f32.xlu0 %v1519
        %v1521 = vpop.xlane.xlu0 %1520
        %v1522 = vsel %vm1114, %v1450, -inf
        %1523 = vmax.xlane.f32.xlu0 %v1522
        %v1524 = vpop.xlane.xlu0 %1523
        %v1525 = vsel %vm1114, %v1499, -inf
        %1526 = vmax.xlane.f32.xlu0 %v1525
        %v1527 = vpop.xlane.xlu0 %1526
        %v1528 = vsub.f32 %v1156, %v1506
        %v1529 = vsub.f32 %v1205, %v1509
        %v1530 = vsub.f32 %v1254, %v1512
        %v1531 = vsub.f32 %v1303, %v1515
        %v1532 = vsub.f32 %v1352, %v1518
        %v1533 = vsub.f32 %v1401, %v1521
        %v1534 = vsub.f32 %v1450, %v1524
        %v1535 = vsub.f32 %v1499, %v1527
        %v1536 = vmul.f32 %v1528, 1.442695
        %v1537 = vpow.pop %v1536
        %v1538 = vmul.f32 %v1529, 1.442695
        %v1539 = vpow.pop %v1538
        %v1540 = vmul.f32 %v1530, 1.442695
        %v1541 = vpow.pop %v1540
        %v1542 = vmul.f32 %v1531, 1.442695
        %v1543 = vpow.pop %v1542
        %v1544 = vmul.f32 %v1532, 1.442695
        %v1545 = vpow.pop %v1544
        %v1546 = vmul.f32 %v1533, 1.442695
        %v1547 = vpow.pop %v1546
        %v1548 = vmul.f32 %v1534, 1.442695
        %v1549 = vpow.pop %v1548
        %v1550 = vmul.f32 %v1535, 1.442695
        %v1551 = vpow.pop %v1550
        %v1552 = vsel %vm1114, %v1537, 0.0
        %1553 = vadd.xlane.f32.xlu0 %v1552
        %v1554 = vpop.xlane.xlu0 %1553
        %v1555 = vsel %vm1114, %v1539, 0.0
        %1556 = vadd.xlane.f32.xlu0 %v1555
        %v1557 = vpop.xlane.xlu0 %1556
        %v1558 = vsel %vm1114, %v1541, 0.0
        %1559 = vadd.xlane.f32.xlu0 %v1558
        %v1560 = vpop.xlane.xlu0 %1559
        %v1561 = vsel %vm1114, %v1543, 0.0
        %1562 = vadd.xlane.f32.xlu0 %v1561
        %v1563 = vpop.xlane.xlu0 %1562
        %v1564 = vsel %vm1114, %v1545, 0.0
        %1565 = vadd.xlane.f32.xlu0 %v1564
        %v1566 = vpop.xlane.xlu0 %1565
        %v1567 = vsel %vm1114, %v1547, 0.0
        %1568 = vadd.xlane.f32.xlu0 %v1567
        %v1569 = vpop.xlane.xlu0 %1568
        %v1570 = vsel %vm1114, %v1549, 0.0
        %1571 = vadd.xlane.f32.xlu0 %v1570
        %v1572 = vpop.xlane.xlu0 %1571
        %v1573 = vsel %vm1114, %v1551, 0.0
        %1574 = vadd.xlane.f32.xlu0 %v1573
        %v1575 = vpop.xlane.xlu0 %1574
        %v1576 = vrcp.pop %v1554
        %v1577 = vrcp.pop %v1557
        %v1578 = vrcp.pop %v1560
        %v1579 = vrcp.pop %v1563
        %v1580 = vrcp.pop %v1566
        %v1581 = vrcp.pop %v1569
        %v1582 = vrcp.pop %v1572
        %v1583 = vrcp.pop %v1575
        %v1584 = vmul.f32 %v1537, %v1576
        %v1585 = vmul.f32 %v1539, %v1577
        %v1586 = vmul.f32 %v1541, %v1578
        %v1587 = vmul.f32 %v1543, %v1579
        %v1588 = vmul.f32 %v1545, %v1580
        %v1589 = vmul.f32 %v1547, %v1581
        %v1590 = vmul.f32 %v1549, %v1582
        %v1591 = vmul.f32 %v1551, %v1583
        %v1592 = vpack.c.bf16 %v1584, %v1584
        %v1593 = vpack.c.bf16 %v1585, %v1585
        %v1594 = vpack.c.bf16 %v1586, %v1586
        %v1595 = vpack.c.bf16 %v1587, %v1587
        %v1596 = vpack.c.bf16 %v1588, %v1588
        %v1597 = vpack.c.bf16 %v1589, %v1589
        %v1598 = vpack.c.bf16 %v1590, %v1590
        %v1599 = vpack.c.bf16 %v1591, %v1591
        %1600 = vrot.lane.b32.xlu0 %v1103, 64
        %v1601 = vpop.permute.xlu0 %1600
        %v1603 = vsel %vm1114, %v1592, 0
        %vm1605 = vcmask 1043456
        %v1607 = vsel %vm1605, %v1601, 0
        %1609 = vmatprep.subr.bf16.mxu0 0
        %1610 = vmatpush1.bf16.msra.mxu0 %v1607
        %1611 = vmatprep.subr.bf16.mxu0 0
        %1612 = vmatpush1.bf16.msra.mxu0 0
        %1613 = vmatprep.subr.bf16.mxu0 0
        %1614 = vmatpush1.bf16.msra.mxu0 0
        %1615 = vmatprep.subr.bf16.mxu0 0
        %1616 = vmatpush1.bf16.msra.mxu0 0
        %1617 = vmatprep.subr.bf16.mxu0 0
        %1618 = vmatpush1.bf16.msra.mxu0 0
        %1619 = vmatprep.subr.bf16.mxu0 0
        %1620 = vmatpush1.bf16.msra.mxu0 0
        %1621 = vmatprep.subr.bf16.mxu0 0
        %1622 = vmatpush1.bf16.msra.mxu0 0
        %1623 = vmatprep.subr.bf16.mxu0 0
        %1624 = vmatpush1.bf16.msra.mxu0 0
        %1625 = vmatprep.subr.bf16.mxu0 0
        %1626 = vmatpush1.bf16.msra.mxu0 0
        %1627 = vmatprep.subr.bf16.mxu0 0
        %1628 = vmatpush1.bf16.msra.mxu0 0
        %1629 = vmatprep.subr.bf16.mxu0 0
        %1630 = vmatpush1.bf16.msra.mxu0 0
        %1631 = vmatprep.subr.bf16.mxu0 0
        %1632 = vmatpush1.bf16.msra.mxu0 0
        %1633 = vmatprep.subr.bf16.mxu0 0
        %1634 = vmatpush1.bf16.msra.mxu0 0
        %1635 = vmatprep.subr.bf16.mxu0 0
        %1636 = vmatpush1.bf16.msra.mxu0 0
        %1637 = vmatprep.subr.bf16.mxu0 0
        %1638 = vmatpush1.bf16.msra.mxu0 0
        %1639 = vmatprep.subr.bf16.mxu0 0
        %1640 = vmatpush1.bf16.msra.mxu0 0
        %1641 = vmatprep.mubr.bf16.mxu0 0
        %1642 = vmatmul.mubr.bf16.gmra.mrb[0].mxu0 %v1603
        %v1643 = vpop.f32.mrb[0].mxu0
        %v1644 = vadd.f32 0.0, %v1643
        %v1645 = vpop.f32.mrb[0].mxu0
        %v1646 = vpop.f32.mrb[0].mxu0
        %v1647 = vpop.f32.mrb[0].mxu0
        %1648 = vdwg.mxu0
        %1649 = vrot.lane.b32.xlu0 %v1104, 64
        %v1650 = vpop.permute.xlu0 %1649
        %v1652 = vsel %vm1114, %v1593, 0
        %v1655 = vsel %vm1605, %v1650, 0
        %1657 = vmatprep.subr.bf16.mxu0 0
        %1658 = vmatpush1.bf16.msra.mxu0 %v1655
        %1659 = vmatprep.subr.bf16.mxu0 0
        %1660 = vmatpush1.bf16.msra.mxu0 0
        %1661 = vmatprep.subr.bf16.mxu0 0
        %1662 = vmatpush1.bf16.msra.mxu0 0
        %1663 = vmatprep.subr.bf16.mxu0 0
        %1664 = vmatpush1.bf16.msra.mxu0 0
        %1665 = vmatprep.subr.bf16.mxu0 0
        %1666 = vmatpush1.bf16.msra.mxu0 0
        %1667 = vmatprep.subr.bf16.mxu0 0
        %1668 = vmatpush1.bf16.msra.mxu0 0
        %1669 = vmatprep.subr.bf16.mxu0 0
        %1670 = vmatpush1.bf16.msra.mxu0 0
        %1671 = vmatprep.subr.bf16.mxu0 0
        %1672 = vmatpush1.bf16.msra.mxu0 0
        %1673 = vmatprep.subr.bf16.mxu0 0
        %1674 = vmatpush1.bf16.msra.mxu0 0
        %1675 = vmatprep.subr.bf16.mxu0 0
        %1676 = vmatpush1.bf16.msra.mxu0 0
        %1677 = vmatprep.subr.bf16.mxu0 0
        %1678 = vmatpush1.bf16.msra.mxu0 0
        %1679 = vmatprep.subr.bf16.mxu0 0
        %1680 = vmatpush1.bf16.msra.mxu0 0
        %1681 = vmatprep.subr.bf16.mxu0 0
        %1682 = vmatpush1.bf16.msra.mxu0 0
        %1683 = vmatprep.subr.bf16.mxu0 0
        %1684 = vmatpush1.bf16.msra.mxu0 0
        %1685 = vmatprep.subr.bf16.mxu0 0
        %1686 = vmatpush1.bf16.msra.mxu0 0
        %1687 = vmatprep.subr.bf16.mxu0 0
        %1688 = vmatpush1.bf16.msra.mxu0 0
        %1689 = vmatprep.mubr.bf16.mxu0 0
        %1690 = vmatmul.mubr.bf16.gmra.mrb[0].mxu0 %v1652
        %v1691 = vpop.f32.mrb[0].mxu0
        %v1692 = vadd.f32 0.0, %v1691
        %v1693 = vpop.f32.mrb[0].mxu0
        %v1694 = vpop.f32.mrb[0].mxu0
        %v1695 = vpop.f32.mrb[0].mxu0
        %1696 = vdwg.mxu0
        %1697 = vrot.lane.b32.xlu0 %v1105, 64
        %v1698 = vpop.permute.xlu0 %1697
        %v1700 = vsel %vm1114, %v1594, 0
        %v1703 = vsel %vm1605, %v1698, 0
        %1705 = vmatprep.subr.bf16.mxu0 0
        %1706 = vmatpush1.bf16.msra.mxu0 %v1703
        %1707 = vmatprep.subr.bf16.mxu0 0
        %1708 = vmatpush1.bf16.msra.mxu0 0
        %1709 = vmatprep.subr.bf16.mxu0 0
        %1710 = vmatpush1.bf16.msra.mxu0 0
        %1711 = vmatprep.subr.bf16.mxu0 0
        %1712 = vmatpush1.bf16.msra.mxu0 0
        %1713 = vmatprep.subr.bf16.mxu0 0
        %1714 = vmatpush1.bf16.msra.mxu0 0
        %1715 = vmatprep.subr.bf16.mxu0 0
        %1716 = vmatpush1.bf16.msra.mxu0 0
        %1717 = vmatprep.subr.bf16.mxu0 0
        %1718 = vmatpush1.bf16.msra.mxu0 0
        %1719 = vmatprep.subr.bf16.mxu0 0
        %1720 = vmatpush1.bf16.msra.mxu0 0
        %1721 = vmatprep.subr.bf16.mxu0 0
        %1722 = vmatpush1.bf16.msra.mxu0 0
        %1723 = vmatprep.subr.bf16.mxu0 0
        %1724 = vmatpush1.bf16.msra.mxu0 0
        %1725 = vmatprep.subr.bf16.mxu0 0
        %1726 = vmatpush1.bf16.msra.mxu0 0
        %1727 = vmatprep.subr.bf16.mxu0 0
        %1728 = vmatpush1.bf16.msra.mxu0 0
        %1729 = vmatprep.subr.bf16.mxu0 0
        %1730 = vmatpush1.bf16.msra.mxu0 0
        %1731 = vmatprep.subr.bf16.mxu0 0
        %1732 = vmatpush1.bf16.msra.mxu0 0
        %1733 = vmatprep.subr.bf16.mxu0 0
        %1734 = vmatpush1.bf16.msra.mxu0 0
        %1735 = vmatprep.subr.bf16.mxu0 0
        %1736 = vmatpush1.bf16.msra.mxu0 0
        %1737 = vmatprep.mubr.bf16.mxu0 0
        %1738 = vmatmul.mubr.bf16.gmra.mrb[0].mxu0 %v1700
        %v1739 = vpop.f32.mrb[0].mxu0
        %v1740 = vadd.f32 0.0, %v1739
        %v1741 = vpop.f32.mrb[0].mxu0
        %v1742 = vpop.f32.mrb[0].mxu0
        %v1743 = vpop.f32.mrb[0].mxu0
        %1744 = vdwg.mxu0
        %1745 = vrot.lane.b32.xlu0 %v1106, 64
        %v1746 = vpop.permute.xlu0 %1745
        %v1748 = vsel %vm1114, %v1595, 0
        %v1751 = vsel %vm1605, %v1746, 0
        %1753 = vmatprep.subr.bf16.mxu0 0
        %1754 = vmatpush1.bf16.msra.mxu0 %v1751
        %1755 = vmatprep.subr.bf16.mxu0 0
        %1756 = vmatpush1.bf16.msra.mxu0 0
        %1757 = vmatprep.subr.bf16.mxu0 0
        %1758 = vmatpush1.bf16.msra.mxu0 0
        %1759 = vmatprep.subr.bf16.mxu0 0
        %1760 = vmatpush1.bf16.msra.mxu0 0
        %1761 = vmatprep.subr.bf16.mxu0 0
        %1762 = vmatpush1.bf16.msra.mxu0 0
        %1763 = vmatprep.subr.bf16.mxu0 0
        %1764 = vmatpush1.bf16.msra.mxu0 0
        %1765 = vmatprep.subr.bf16.mxu0 0
        %1766 = vmatpush1.bf16.msra.mxu0 0
        %1767 = vmatprep.subr.bf16.mxu0 0
        %1768 = vmatpush1.bf16.msra.mxu0 0
        %1769 = vmatprep.subr.bf16.mxu0 0
        %1770 = vmatpush1.bf16.msra.mxu0 0
        %1771 = vmatprep.subr.bf16.mxu0 0
        %1772 = vmatpush1.bf16.msra.mxu0 0
        %1773 = vmatprep.subr.bf16.mxu0 0
        %1774 = vmatpush1.bf16.msra.mxu0 0
        %1775 = vmatprep.subr.bf16.mxu0 0
        %1776 = vmatpush1.bf16.msra.mxu0 0
        %1777 = vmatprep.subr.bf16.mxu0 0
        %1778 = vmatpush1.bf16.msra.mxu0 0
        %1779 = vmatprep.subr.bf16.mxu0 0
        %1780 = vmatpush1.bf16.msra.mxu0 0
        %1781 = vmatprep.subr.bf16.mxu0 0
        %1782 = vmatpush1.bf16.msra.mxu0 0
        %1783 = vmatprep.subr.bf16.mxu0 0
        %1784 = vmatpush1.bf16.msra.mxu0 0
        %1785 = vmatprep.mubr.bf16.mxu0 0
        %1786 = vmatmul.mubr.bf16.gmra.mrb[0].mxu0 %v1748
        %v1787 = vpop.f32.mrb[0].mxu0
        %v1788 = vadd.f32 0.0, %v1787
        %v1789 = vpop.f32.mrb[0].mxu0
        %v1790 = vpop.f32.mrb[0].mxu0
        %v1791 = vpop.f32.mrb[0].mxu0
        %1792 = vdwg.mxu0
        %1793 = vrot.lane.b32.xlu0 %v1107, 64
        %v1794 = vpop.permute.xlu0 %1793
        %v1796 = vsel %vm1114, %v1596, 0
        %v1799 = vsel %vm1605, %v1794, 0
        %1801 = vmatprep.subr.bf16.mxu0 0
        %1802 = vmatpush1.bf16.msra.mxu0 %v1799
        %1803 = vmatprep.subr.bf16.mxu0 0
        %1804 = vmatpush1.bf16.msra.mxu0 0
        %1805 = vmatprep.subr.bf16.mxu0 0
        %1806 = vmatpush1.bf16.msra.mxu0 0
        %1807 = vmatprep.subr.bf16.mxu0 0
        %1808 = vmatpush1.bf16.msra.mxu0 0
        %1809 = vmatprep.subr.bf16.mxu0 0
        %1810 = vmatpush1.bf16.msra.mxu0 0
        %1811 = vmatprep.subr.bf16.mxu0 0
        %1812 = vmatpush1.bf16.msra.mxu0 0
        %1813 = vmatprep.subr.bf16.mxu0 0
        %1814 = vmatpush1.bf16.msra.mxu0 0
        %1815 = vmatprep.subr.bf16.mxu0 0
        %1816 = vmatpush1.bf16.msra.mxu0 0
        %1817 = vmatprep.subr.bf16.mxu0 0
        %1818 = vmatpush1.bf16.msra.mxu0 0
        %1819 = vmatprep.subr.bf16.mxu0 0
        %1820 = vmatpush1.bf16.msra.mxu0 0
        %1821 = vmatprep.subr.bf16.mxu0 0
        %1822 = vmatpush1.bf16.msra.mxu0 0
        %1823 = vmatprep.subr.bf16.mxu0 0
        %1824 = vmatpush1.bf16.msra.mxu0 0
        %1825 = vmatprep.subr.bf16.mxu0 0
        %1826 = vmatpush1.bf16.msra.mxu0 0
        %1827 = vmatprep.subr.bf16.mxu0 0
        %1828 = vmatpush1.bf16.msra.mxu0 0
        %1829 = vmatprep.subr.bf16.mxu0 0
        %1830 = vmatpush1.bf16.msra.mxu0 0
        %1831 = vmatprep.subr.bf16.mxu0 0
        %1832 = vmatpush1.bf16.msra.mxu0 0
        %1833 = vmatprep.mubr.bf16.mxu0 0
        %1834 = vmatmul.mubr.bf16.gmra.mrb[0].mxu0 %v1796
        %v1835 = vpop.f32.mrb[0].mxu0
        %v1836 = vadd.f32 0.0, %v1835
        %v1837 = vpop.f32.mrb[0].mxu0
        %v1838 = vpop.f32.mrb[0].mxu0
        %v1839 = vpop.f32.mrb[0].mxu0
        %1840 = vdwg.mxu0
        %1841 = vrot.lane.b32.xlu0 %v1108, 64
        %v1842 = vpop.permute.xlu0 %1841
        %v1844 = vsel %vm1114, %v1597, 0
        %v1847 = vsel %vm1605, %v1842, 0
        %1849 = vmatprep.subr.bf16.mxu0 0
        %1850 = vmatpush1.bf16.msra.mxu0 %v1847
        %1851 = vmatprep.subr.bf16.mxu0 0
        %1852 = vmatpush1.bf16.msra.mxu0 0
        %1853 = vmatprep.subr.bf16.mxu0 0
        %1854 = vmatpush1.bf16.msra.mxu0 0
        %1855 = vmatprep.subr.bf16.mxu0 0
        %1856 = vmatpush1.bf16.msra.mxu0 0
        %1857 = vmatprep.subr.bf16.mxu0 0
        %1858 = vmatpush1.bf16.msra.mxu0 0
        %1859 = vmatprep.subr.bf16.mxu0 0
        %1860 = vmatpush1.bf16.msra.mxu0 0
        %1861 = vmatprep.subr.bf16.mxu0 0
        %1862 = vmatpush1.bf16.msra.mxu0 0
        %1863 = vmatprep.subr.bf16.mxu0 0
        %1864 = vmatpush1.bf16.msra.mxu0 0
        %1865 = vmatprep.subr.bf16.mxu0 0
        %1866 = vmatpush1.bf16.msra.mxu0 0
        %1867 = vmatprep.subr.bf16.mxu0 0
        %1868 = vmatpush1.bf16.msra.mxu0 0
        %1869 = vmatprep.subr.bf16.mxu0 0
        %1870 = vmatpush1.bf16.msra.mxu0 0
        %1871 = vmatprep.subr.bf16.mxu0 0
        %1872 = vmatpush1.bf16.msra.mxu0 0
        %1873 = vmatprep.subr.bf16.mxu0 0
        %1874 = vmatpush1.bf16.msra.mxu0 0
        %1875 = vmatprep.subr.bf16.mxu0 0
        %1876 = vmatpush1.bf16.msra.mxu0 0
        %1877 = vmatprep.subr.bf16.mxu0 0
        %1878 = vmatpush1.bf16.msra.mxu0 0
        %1879 = vmatprep.subr.bf16.mxu0 0
        %1880 = vmatpush1.bf16.msra.mxu0 0
        %1881 = vmatprep.mubr.bf16.mxu0 0
        %1882 = vmatmul.mubr.bf16.gmra.mrb[0].mxu0 %v1844
        %v1883 = vpop.f32.mrb[0].mxu0
        %v1884 = vadd.f32 0.0, %v1883
        %v1885 = vpop.f32.mrb[0].mxu0
        %v1886 = vpop.f32.mrb[0].mxu0
        %v1887 = vpop.f32.mrb[0].mxu0
        %1888 = vdwg.mxu0
        %1889 = vrot.lane.b32.xlu0 %v1109, 64
        %v1890 = vpop.permute.xlu0 %1889
        %v1892 = vsel %vm1114, %v1598, 0
        %v1895 = vsel %vm1605, %v1890, 0
        %1897 = vmatprep.subr.bf16.mxu0 0
        %1898 = vmatpush1.bf16.msra.mxu0 %v1895
        %1899 = vmatprep.subr.bf16.mxu0 0
        %1900 = vmatpush1.bf16.msra.mxu0 0
        %1901 = vmatprep.subr.bf16.mxu0 0
        %1902 = vmatpush1.bf16.msra.mxu0 0
        %1903 = vmatprep.subr.bf16.mxu0 0
        %1904 = vmatpush1.bf16.msra.mxu0 0
        %1905 = vmatprep.subr.bf16.mxu0 0
        %1906 = vmatpush1.bf16.msra.mxu0 0
        %1907 = vmatprep.subr.bf16.mxu0 0
        %1908 = vmatpush1.bf16.msra.mxu0 0
        %1909 = vmatprep.subr.bf16.mxu0 0
        %1910 = vmatpush1.bf16.msra.mxu0 0
        %1911 = vmatprep.subr.bf16.mxu0 0
        %1912 = vmatpush1.bf16.msra.mxu0 0
        %1913 = vmatprep.subr.bf16.mxu0 0
        %1914 = vmatpush1.bf16.msra.mxu0 0
        %1915 = vmatprep.subr.bf16.mxu0 0
        %1916 = vmatpush1.bf16.msra.mxu0 0
        %1917 = vmatprep.subr.bf16.mxu0 0
        %1918 = vmatpush1.bf16.msra.mxu0 0
        %1919 = vmatprep.subr.bf16.mxu0 0
        %1920 = vmatpush1.bf16.msra.mxu0 0
        %1921 = vmatprep.subr.bf16.mxu0 0
        %1922 = vmatpush1.bf16.msra.mxu0 0
        %1923 = vmatprep.subr.bf16.mxu0 0
        %1924 = vmatpush1.bf16.msra.mxu0 0
        %1925 = vmatprep.subr.bf16.mxu0 0
        %1926 = vmatpush1.bf16.msra.mxu0 0
        %1927 = vmatprep.subr.bf16.mxu0 0
        %1928 = vmatpush1.bf16.msra.mxu0 0
        %1929 = vmatprep.mubr.bf16.mxu0 0
        %1930 = vmatmul.mubr.bf16.gmra.mrb[0].mxu0 %v1892
        %v1931 = vpop.f32.mrb[0].mxu0
        %v1932 = vadd.f32 0.0, %v1931
        %v1933 = vpop.f32.mrb[0].mxu0
        %v1934 = vpop.f32.mrb[0].mxu0
        %v1935 = vpop.f32.mrb[0].mxu0
        %1936 = vdwg.mxu0
        %1937 = vrot.lane.b32.xlu0 %v1110, 64
        %v1938 = vpop.permute.xlu0 %1937
        %v1940 = vsel %vm1114, %v1599, 0
        %v1943 = vsel %vm1605, %v1938, 0
        %1945 = vmatprep.subr.bf16.mxu0 0
        %1946 = vmatpush1.bf16.msra.mxu0 %v1943
        %1947 = vmatprep.subr.bf16.mxu0 0
        %1948 = vmatpush1.bf16.msra.mxu0 0
        %1949 = vmatprep.subr.bf16.mxu0 0
        %1950 = vmatpush1.bf16.msra.mxu0 0
        %1951 = vmatprep.subr.bf16.mxu0 0
        %1952 = vmatpush1.bf16.msra.mxu0 0
        %1953 = vmatprep.subr.bf16.mxu0 0
        %1954 = vmatpush1.bf16.msra.mxu0 0
        %1955 = vmatprep.subr.bf16.mxu0 0
        %1956 = vmatpush1.bf16.msra.mxu0 0
        %1957 = vmatprep.subr.bf16.mxu0 0
        %1958 = vmatpush1.bf16.msra.mxu0 0
        %1959 = vmatprep.subr.bf16.mxu0 0
        %1960 = vmatpush1.bf16.msra.mxu0 0
        %1961 = vmatprep.subr.bf16.mxu0 0
        %1962 = vmatpush1.bf16.msra.mxu0 0
        %1963 = vmatprep.subr.bf16.mxu0 0
        %1964 = vmatpush1.bf16.msra.mxu0 0
        %1965 = vmatprep.subr.bf16.mxu0 0
        %1966 = vmatpush1.bf16.msra.mxu0 0
        %1967 = vmatprep.subr.bf16.mxu0 0
        %1968 = vmatpush1.bf16.msra.mxu0 0
        %1969 = vmatprep.subr.bf16.mxu0 0
        %1970 = vmatpush1.bf16.msra.mxu0 0
        %1971 = vmatprep.subr.bf16.mxu0 0
        %1972 = vmatpush1.bf16.msra.mxu0 0
        %1973 = vmatprep.subr.bf16.mxu0 0
        %1974 = vmatpush1.bf16.msra.mxu0 0
        %1975 = vmatprep.subr.bf16.mxu0 0
        %1976 = vmatpush1.bf16.msra.mxu0 0
        %1977 = vmatprep.mubr.bf16.mxu0 0
        %1978 = vmatmul.mubr.bf16.gmra.mrb[0].mxu0 %v1940
        %v1979 = vpop.f32.mrb[0].mxu0
        %v1980 = vadd.f32 0.0, %v1979
        %v1981 = vpop.f32.mrb[0].mxu0
        %v1982 = vpop.f32.mrb[0].mxu0
        %v1983 = vpop.f32.mrb[0].mxu0
        %1984 = vdwg.mxu0
        %1986 = vrot.lane.b32.xlu0 %v1740, 8
        %v1987 = vpop.permute.xlu0 %1986
        %1990 = vrot.lane.b32.xlu0 %v1836, 16
        %v1991 = vpop.permute.xlu0 %1990
        %1994 = vrot.lane.b32.xlu0 %v1932, 24
        %v1995 = vpop.permute.xlu0 %1994
        %v1997 = vsel %vm1114, %v1644, %v1987
        %vm1998 = vcmask 130048
        %v1999 = vsel %vm1998, %v1997, %v1991
        %vm2000 = vcmask 195584
        %v2001 = vsel %vm2000, %v1999, %v1995
        %2003 = vrot.lane.b32.xlu0 %v1788, 8
        %v2004 = vpop.permute.xlu0 %2003
        %2007 = vrot.lane.b32.xlu0 %v1884, 16
        %v2008 = vpop.permute.xlu0 %2007
        %2011 = vrot.lane.b32.xlu0 %v1980, 24
        %v2012 = vpop.permute.xlu0 %2011
        %v2014 = vsel %vm1114, %v1692, %v2004
        %v2015 = vsel %vm1998, %v2014, %v2008
        %v2016 = vsel %vm2000, %v2015, %v2012
        %v2017 = vpack.c.bf16 %v2016, %v2001
        %v2018 = vld [vmem:[%s785] sm:$0xf]
        %v2019 = vld [vmem:[%s785 + $0x4] sm:$0xf]
        %v2020 = vld [vmem:[%s785 + $0x8] sm:$0xf]
        %v2021 = vld [vmem:[%s785 + $0xc] sm:$0xf]
        %v2022 = vld [vmem:[%s793] sm:$0x1]
        %v2024 = vlaneseq
        %v2025 = vshrl.u32 %v2024, 7
        %v2026 = vsub.s32 0, %v2025
        %v2027 = vrot.slane %v2022, %v2026
        %v2033 = vunpack.c.l.b16 %v2018
        %v2034 = vunpack.c.l.b16 %v2019
        %v2035 = vunpack.c.l.b16 %v2020
        %v2036 = vunpack.c.l.b16 %v2021
        %v2037 = vpack.c.b16 %v2034, %v2033
        %v2038 = vpack.c.b16 %v2036, %v2035
        %v2042 = vsel %vm957, %v2017, 0
        %2044 = vmatprep.subr.bf16.mxu0 0
        %2045 = vmatpush1.bf16.msra.mxu0 %v2037
        %2046 = vmatprep.subr.bf16.mxu0 0
        %2047 = vmatpush1.bf16.msra.mxu0 %v2038
        %2048 = vmatprep.subr.bf16.mxu0 0
        %2049 = vmatpush1.bf16.msra.mxu0 0
        %2050 = vmatprep.subr.bf16.mxu0 0
        %2051 = vmatpush1.bf16.msra.mxu0 0
        %2052 = vmatprep.subr.bf16.mxu0 0
        %2053 = vmatpush1.bf16.msra.mxu0 0
        %2054 = vmatprep.subr.bf16.mxu0 0
        %2055 = vmatpush1.bf16.msra.mxu0 0
        %2056 = vmatprep.subr.bf16.mxu0 0
        %2057 = vmatpush1.bf16.msra.mxu0 0
        %2058 = vmatprep.subr.bf16.mxu0 0
        %2059 = vmatpush1.bf16.msra.mxu0 0
        %2060 = vmatprep.subr.bf16.mxu0 0
        %2061 = vmatpush1.bf16.msra.mxu0 0
        %2062 = vmatprep.subr.bf16.mxu0 0
        %2063 = vmatpush1.bf16.msra.mxu0 0
        %2064 = vmatprep.subr.bf16.mxu0 0
        %2065 = vmatpush1.bf16.msra.mxu0 0
        %2066 = vmatprep.subr.bf16.mxu0 0
        %2067 = vmatpush1.bf16.msra.mxu0 0
        %2068 = vmatprep.subr.bf16.mxu0 0
        %2069 = vmatpush1.bf16.msra.mxu0 0
        %2070 = vmatprep.subr.bf16.mxu0 0
        %2071 = vmatpush1.bf16.msra.mxu0 0
        %2072 = vmatprep.subr.bf16.mxu0 0
        %2073 = vmatpush1.bf16.msra.mxu0 0
        %2074 = vmatprep.subr.bf16.mxu0 0
        %2075 = vmatpush1.bf16.msra.mxu0 0
        %2076 = vmatprep.mubr.bf16.mxu0 0
        %2077 = vmatmul.mubr.bf16.gmra.mrb[0].mxu0 %v2042
        %v2078 = vpop.f32.mrb[0].mxu0
        %v2079 = vadd.f32 %v2027, %v2078
        %v2080 = vpop.f32.mrb[0].mxu0
        %v2081 = vpop.f32.mrb[0].mxu0
        %v2082 = vadd.f32 %v2027, %v2081
        %v2083 = vpop.f32.mrb[0].mxu0
        %2084 = vdwg.mxu0
        %v2085 = vadd.f32 %v953, %v2079
        %v2086 = vadd.f32 %v954, %v2082
        %v2087 = vld [vmem:[%s801] sm:$0x1]
        %v2088 = vld [vmem:[%s809] sm:$0x1]
        %v2089 = vsel %vm957, %v2085, 0.0
        %2090 = vadd.xlane.f32.xlu0 %v2089
        %v2091 = vpop.xlane.xlu0 %2090
        %v2092 = vsel %vm957, %v2086, 0.0
        %2093 = vadd.xlane.f32.xlu0 %v2092
        %v2094 = vpop.xlane.xlu0 %2093
        %v2095 = vmul.f32 %v2091, %v964
        %v2096 = vmul.f32 %v2094, %v964
        %v2097 = vsub.f32 %v2085, %v2095
        %v2098 = vsub.f32 %v2086, %v2096
        %v2099 = vmul.f32 %v2097, %v2097
        %v2100 = vmul.f32 %v2098, %v2098
        %v2101 = vsel %vm957, %v2099, 0.0
        %2102 = vadd.xlane.f32.xlu0 %v2101
        %v2103 = vpop.xlane.xlu0 %2102
        %v2104 = vsel %vm957, %v2100, 0.0
        %2105 = vadd.xlane.f32.xlu0 %v2104
        %v2106 = vpop.xlane.xlu0 %2105
        %v2107 = vmul.f32 %v2103, 0.032258064
        %v2108 = vmul.f32 %v2106, 0.032258064
        %v2109 = vrsqrt.pop %v2107
        %v2110 = vmul.f32 %v2107, %v2109
        %vm2111 = vcmp.eq.f32.partialorder %v2107, inf
        %v2112 = vsel %vm2111, %v2107, %v2110
        %vm2113 = vcmp.eq.f32.partialorder %v2107, 0.0
        %v2114 = vand.u32 %v2107, 2147483648
        %v2115 = vsel %vm2113, %v2114, %v2112
        %v2116 = vrsqrt.pop %v2108
        %v2117 = vmul.f32 %v2108, %v2116
        %vm2118 = vcmp.eq.f32.partialorder %v2108, inf
        %v2119 = vsel %vm2118, %v2108, %v2117
        %vm2120 = vcmp.eq.f32.partialorder %v2108, 0.0
        %v2121 = vand.u32 %v2108, 2147483648
        %v2122 = vsel %vm2120, %v2121, %v2119
        %v2123 = vadd.f32 %v2115, 1e-06
        %v2124 = vadd.f32 %v2122, 1e-06
        %v2125 = vrcp.pop %v2123
        %v2126 = vrcp.pop %v2124
        %v2128 = vlaneseq
        %v2129 = vshrl.u32 %v2128, 7
        %v2130 = vsub.s32 0, %v2129
        %v2131 = vrot.slane %v2087, %v2130
        %v2133 = vmul.f32 %v2131, %v2097
        %v2134 = vmul.f32 %v2131, %v2098
        %v2135 = vmul.f32 %v2133, %v2125
        %v2136 = vmul.f32 %v2134, %v2126
        %v2138 = vlaneseq
        %v2139 = vshrl.u32 %v2138, 7
        %v2140 = vsub.s32 0, %v2139
        %v2141 = vrot.slane %v2088, %v2140
        %v2143 = vadd.f32 %v2135, %v2141
        %v2144 = vadd.f32 %v2136, %v2141
        %v2145 = vpack.c.bf16 %v2144, %v2143
        %v2146 = vld [vmem:[%s818] sm:$0xf]
        %v2147 = vld [vmem:[%s818 + $0x4] sm:$0xf]
        %v2148 = vld [vmem:[%s818 + $0x8] sm:$0xf]
        %v2149 = vld [vmem:[%s818 + $0xc] sm:$0xf]
        %v2150 = vld [vmem:[%s826] sm:$0x1]
        %v2152 = vlaneseq
        %v2153 = vshrl.u32 %v2152, 7
        %v2154 = vsub.s32 0, %v2153
        %v2155 = vrot.slane %v2150, %v2154
        %v2161 = vunpack.c.l.b16 %v2146
        %v2162 = vunpack.c.l.b16 %v2147
        %v2163 = vunpack.c.l.b16 %v2148
        %v2164 = vunpack.c.l.b16 %v2149
        %v2165 = vpack.c.b16 %v2162, %v2161
        %v2166 = vpack.c.b16 %v2164, %v2163
        %v2170 = vsel %vm957, %v2145, 0
        %2172 = vmatprep.subr.bf16.mxu0 0
        %2173 = vmatpush1.bf16.msra.mxu0 %v2165
        %2174 = vmatprep.subr.bf16.mxu0 0
        %2175 = vmatpush1.bf16.msra.mxu0 %v2166
        %2176 = vmatprep.subr.bf16.mxu0 0
        %2177 = vmatpush1.bf16.msra.mxu0 0
        %2178 = vmatprep.subr.bf16.mxu0 0
        %2179 = vmatpush1.bf16.msra.mxu0 0
        %2180 = vmatprep.subr.bf16.mxu0 0
        %2181 = vmatpush1.bf16.msra.mxu0 0
        %2182 = vmatprep.subr.bf16.mxu0 0
        %2183 = vmatpush1.bf16.msra.mxu0 0
        %2184 = vmatprep.subr.bf16.mxu0 0
        %2185 = vmatpush1.bf16.msra.mxu0 0
        %2186 = vmatprep.subr.bf16.mxu0 0
        %2187 = vmatpush1.bf16.msra.mxu0 0
        %2188 = vmatprep.subr.bf16.mxu0 0
        %2189 = vmatpush1.bf16.msra.mxu0 0
        %2190 = vmatprep.subr.bf16.mxu0 0
        %2191 = vmatpush1.bf16.msra.mxu0 0
        %2192 = vmatprep.subr.bf16.mxu0 0
        %2193 = vmatpush1.bf16.msra.mxu0 0
        %2194 = vmatprep.subr.bf16.mxu0 0
        %2195 = vmatpush1.bf16.msra.mxu0 0
        %2196 = vmatprep.subr.bf16.mxu0 0
        %2197 = vmatpush1.bf16.msra.mxu0 0
        %2198 = vmatprep.subr.bf16.mxu0 0
        %2199 = vmatpush1.bf16.msra.mxu0 0
        %2200 = vmatprep.subr.bf16.mxu0 0
        %2201 = vmatpush1.bf16.msra.mxu0 0
        %2202 = vmatprep.subr.bf16.mxu0 0
        %2203 = vmatpush1.bf16.msra.mxu0 0
        %2204 = vmatprep.mubr.bf16.mxu0 0
        %2205 = vmatmul.mubr.bf16.gmra.mrb[0].mxu0 %v2170
        %v2206 = vpop.f32.mrb[0].mxu0
        %v2207 = vadd.f32 %v2155, %v2206
        %v2208 = vpop.f32.mrb[0].mxu0
        %v2209 = vpop.f32.mrb[0].mxu0
        %v2210 = vadd.f32 %v2155, %v2209
        %v2211 = vpop.f32.mrb[0].mxu0
        %2212 = vdwg.mxu0
        %v2213 = vmax.f32 %v2207, 0.0
        %v2214 = vmax.f32 %v2210, 0.0
        %v2215 = vpack.c.bf16 %v2214, %v2213
        %v2216 = vld [vmem:[%s835] sm:$0xf]
        %v2217 = vld [vmem:[%s835 + $0x4] sm:$0xf]
        %v2218 = vld [vmem:[%s835 + $0x8] sm:$0xf]
        %v2219 = vld [vmem:[%s835 + $0xc] sm:$0xf]
        %v2220 = vld [vmem:[%s835 + $0x10] sm:$0xf]
        %v2221 = vld [vmem:[%s835 + $0x14] sm:$0xf]
        %v2222 = vld [vmem:[%s835 + $0x18] sm:$0xf]
        %v2223 = vld [vmem:[%s835 + $0x1c] sm:$0xf]
        %v2224 = vld [vmem:[%s843] sm:$0x1]
        %v2226 = vlaneseq
        %v2227 = vshrl.u32 %v2226, 7
        %v2228 = vsub.s32 0, %v2227
        %v2229 = vrot.slane %v2224, %v2228
        %v2239 = vunpack.c.l.b16 %v2216
        %v2240 = vunpack.c.l.b16 %v2217
        %v2241 = vunpack.c.l.b16 %v2218
        %v2242 = vunpack.c.l.b16 %v2219
        %v2243 = vunpack.c.l.b16 %v2220
        %v2244 = vunpack.c.l.b16 %v2221
        %v2245 = vunpack.c.l.b16 %v2222
        %v2246 = vunpack.c.l.b16 %v2223
        %v2247 = vpack.c.b16 %v2240, %v2239
        %v2248 = vpack.c.b16 %v2242, %v2241
        %v2249 = vpack.c.b16 %v2244, %v2243
        %v2250 = vpack.c.b16 %v2246, %v2245
        %vm2255 = vcmask 523264
        %v2257 = vsel %vm2255, %v2215, 0
        %2259 = vmatprep.subr.bf16.mxu0 0
        %2260 = vmatpush1.bf16.msra.mxu0 %v2247
        %2261 = vmatprep.subr.bf16.mxu0 0
        %2262 = vmatpush1.bf16.msra.mxu0 %v2248
        %2263 = vmatprep.subr.bf16.mxu0 0
        %2264 = vmatpush1.bf16.msra.mxu0 %v2249
        %2265 = vmatprep.subr.bf16.mxu0 0
        %2266 = vmatpush1.bf16.msra.mxu0 %v2250
        %2267 = vmatprep.subr.bf16.mxu0 0
        %2268 = vmatpush1.bf16.msra.mxu0 0
        %2269 = vmatprep.subr.bf16.mxu0 0
        %2270 = vmatpush1.bf16.msra.mxu0 0
        %2271 = vmatprep.subr.bf16.mxu0 0
        %2272 = vmatpush1.bf16.msra.mxu0 0
        %2273 = vmatprep.subr.bf16.mxu0 0
        %2274 = vmatpush1.bf16.msra.mxu0 0
        %2275 = vmatprep.subr.bf16.mxu0 0
        %2276 = vmatpush1.bf16.msra.mxu0 0
        %2277 = vmatprep.subr.bf16.mxu0 0
        %2278 = vmatpush1.bf16.msra.mxu0 0
        %2279 = vmatprep.subr.bf16.mxu0 0
        %2280 = vmatpush1.bf16.msra.mxu0 0
        %2281 = vmatprep.subr.bf16.mxu0 0
        %2282 = vmatpush1.bf16.msra.mxu0 0
        %2283 = vmatprep.subr.bf16.mxu0 0
        %2284 = vmatpush1.bf16.msra.mxu0 0
        %2285 = vmatprep.subr.bf16.mxu0 0
        %2286 = vmatpush1.bf16.msra.mxu0 0
        %2287 = vmatprep.subr.bf16.mxu0 0
        %2288 = vmatpush1.bf16.msra.mxu0 0
        %2289 = vmatprep.subr.bf16.mxu0 0
        %2290 = vmatpush1.bf16.msra.mxu0 0
        %2291 = vmatprep.mubr.bf16.mxu0 0
        %2292 = vmatmul.mubr.bf16.gmra.mrb[0].mxu0 %v2257
        %v2293 = vpop.f32.mrb[0].mxu0
        %v2294 = vadd.f32 %v2229, %v2293
        %v2295 = vpop.f32.mrb[0].mxu0
        %v2296 = vpop.f32.mrb[0].mxu0
        %v2297 = vadd.f32 %v2229, %v2296
        %v2298 = vpop.f32.mrb[0].mxu0
        %2299 = vdwg.mxu0
        %v2300 = vadd.f32 %v2085, %v2294
        %v2301 = vadd.f32 %v2086, %v2297
        %2302 = vst.msk [vmem:[#allocation2] sm:$0xff] %vm957, %v2300
        %2303 = vst.msk [vmem:[#allocation2 + $0x8] sm:$0xff] %vm957, %v2301
        %p2304 = scmp.eq.s32.totalorder %s52, 1
        // Predicated region
        $region145: #{tpu_custom_call.1} parent=79 // pred_check
          %p2305 = pneg %p2304
        $region146: #{tpu_custom_call.1} parent=79 // pred_check_branch
          %2307 = sbr.rel (%p2305) target = $region148
        $region147: #{tpu_custom_call.1} parent=79 // pred_region
          %v2308 = vld [vmem:[#allocation24] sm:$0x1]
          %v2309 = vld [vmem:[#allocation26] sm:$0x1]
          %v2310 = vsel %vm957, %v2300, 0.0
          %2311 = vadd.xlane.f32.xlu0 %v2310
          %v2312 = vpop.xlane.xlu0 %2311
          %v2313 = vsel %vm957, %v2301, 0.0
          %2314 = vadd.xlane.f32.xlu0 %v2313
          %v2315 = vpop.xlane.xlu0 %2314
          %v2316 = vmul.f32 %v2312, %v964
          %v2317 = vmul.f32 %v2315, %v964
          %v2318 = vsub.f32 %v2300, %v2316
          %v2319 = vsub.f32 %v2301, %v2317
          %v2320 = vmul.f32 %v2318, %v2318
          %v2321 = vmul.f32 %v2319, %v2319
          %v2322 = vsel %vm957, %v2320, 0.0
          %2323 = vadd.xlane.f32.xlu0 %v2322
          %v2324 = vpop.xlane.xlu0 %2323
          %v2325 = vsel %vm957, %v2321, 0.0
          %2326 = vadd.xlane.f32.xlu0 %v2325
          %v2327 = vpop.xlane.xlu0 %2326
          %v2328 = vmul.f32 %v2324, 0.032258064
          %v2329 = vmul.f32 %v2327, 0.032258064
          %v2330 = vrsqrt.pop %v2328
          %v2331 = vmul.f32 %v2328, %v2330
          %vm2332 = vcmp.eq.f32.partialorder %v2328, inf
          %v2333 = vsel %vm2332, %v2328, %v2331
          %vm2334 = vcmp.eq.f32.partialorder %v2328, 0.0
          %v2335 = vand.u32 %v2328, 2147483648
          %v2336 = vsel %vm2334, %v2335, %v2333
          %v2337 = vrsqrt.pop %v2329
          %v2338 = vmul.f32 %v2329, %v2337
          %vm2339 = vcmp.eq.f32.partialorder %v2329, inf
          %v2340 = vsel %vm2339, %v2329, %v2338
          %vm2341 = vcmp.eq.f32.partialorder %v2329, 0.0
          %v2342 = vand.u32 %v2329, 2147483648
          %v2343 = vsel %vm2341, %v2342, %v2340
          %v2344 = vadd.f32 %v2336, 1e-06
          %v2345 = vadd.f32 %v2343, 1e-06
          %v2346 = vrcp.pop %v2344
          %v2347 = vrcp.pop %v2345
          %v2349 = vlaneseq
          %v2350 = vshrl.u32 %v2349, 7
          %v2351 = vsub.s32 0, %v2350
          %v2352 = vrot.slane %v2308, %v2351
          %v2354 = vmul.f32 %v2352, %v2318
          %v2355 = vmul.f32 %v2352, %v2319
          %v2356 = vmul.f32 %v2354, %v2346
          %v2357 = vmul.f32 %v2355, %v2347
          %v2359 = vlaneseq
          %v2360 = vshrl.u32 %v2359, 7
          %v2361 = vsub.s32 0, %v2360
          %v2362 = vrot.slane %v2309, %v2361
          %v2364 = vadd.f32 %v2356, %v2362
          %v2365 = vadd.f32 %v2357, %v2362
          %2366 = vst.msk [vmem:[#allocation27] sm:$0xff] %vm957, %v2364
          %s2367 = scalar_lea.vmem [#allocation27], 8
          %2368 = vst.msk [vmem:[%s2367] sm:$0xff] %vm957, %v2365
        $region148: #{tpu_custom_call.1} parent=79 // pred_fallthru
          _
        // Predicated region
        $region149: #{tpu_custom_call.1} parent=79 // pred_check
          %p2369 = pneg %p457
        $region150: #{tpu_custom_call.1} parent=79 // pred_check_branch
          %2371 = sbr.rel (%p2369) target = $region152
        $region151: #{tpu_custom_call.1} parent=79 // pred_region
          %s2372 = smul.u32 2, %s51
          %s2374 = ssub.s32 256, 256
          %2375 = vsyncadd [#allocation5], %s2374
          %s2376 = smul.addr %s2372, 128
          %s2377 = scalar_lea.hbm %s15, %s2376
          %s2378 = sshll.u32 [#allocation27], 4
          %s2379 = int_to_ptr.vmem [resolvable:$true] %s2378
          %2384 = dma.vmem_to_hbm [thread:$0]  %s2379, 256, %s2377, [#allocation5], 128, 128, 8
        $region152: #{tpu_custom_call.1} parent=79 // pred_fallthru
          _
        // Predicated region
        $region153: #{tpu_custom_call.1} parent=79 // pred_check
          %p2385 = pneg %p457
        $region154: #{tpu_custom_call.1} parent=79 // pred_check_branch
          %2387 = sbr.rel (%p2385) target = $region156
        $region155: #{tpu_custom_call.1} parent=79 // pred_region
          %2388 = dma.done [#allocation5], 256
        $region156: #{tpu_custom_call.1} parent=79 // pred_fallthru
          _
      $region80: #{tpu_custom_call.1} parent=5 // pred_fallthru
        _
      %p2389 = scmp.le.s32.totalorder 2, %s42
      // Predicated region
      $region157: #{tpu_custom_call.1} parent=5 // pred_check
        %p2390 = pneg %p2389
      $region158: #{tpu_custom_call.1} parent=5 // pred_check_branch
        %2392 = sbr.rel (%p2390) target = $region160
      $region159: #{tpu_custom_call.1} parent=5 // pred_region
        %s2393 = ssub.s32 %s42, 2
      $region160: #{tpu_custom_call.1} parent=5 // pred_fallthru
        _
    $region6: #{tpu_custom_call.1} parent=1 // loop_footer
      %s46 = sadd.s32 1, %s42
    $region7: #{tpu_custom_call.1} parent=1 // loop_footer_branch
      %41 = sbr.rel target = $region3
    $region8: #{tpu_custom_call.1} parent=1 // loop_exit
      _
    %2394 = vsyncpa [#allocation4], 1
    %s2395 = scalar_lea.sflag [#allocation4], 1
    %2396 = vsyncpa %s2395, 1
    %2397 = vsyncpa [#allocation7], 1
    %s2398 = scalar_lea.sflag [#allocation7], 1
    %2399 = vsyncpa %s2398, 1
    %2400 = vsyncpa [#allocation10], 1
    %s2401 = scalar_lea.sflag [#allocation10], 1
    %2402 = vsyncpa %s2401, 1
    %2403 = vsyncpa [#allocation13], 1
    %s2404 = scalar_lea.sflag [#allocation13], 1
    %2405 = vsyncpa %s2404, 1
    %2406 = vsyncpa [#allocation16], 1
    %s2407 = scalar_lea.sflag [#allocation16], 1
    %2408 = vsyncpa %s2407, 1
    %2409 = vsyncpa [#allocation19], 1
    %s2410 = scalar_lea.sflag [#allocation19], 1
    %2411 = vsyncpa %s2410, 1
    %2412 = vsyncpa [#allocation22], 1
    %s2413 = scalar_lea.sflag [#allocation22], 1
    %2414 = vsyncpa %s2413, 1
    %2415 = vsyncpa [#allocation25], 1
    %2416 = vsyncpa [#allocation5], 1
    %s2417 = scalar_lea.sflag [#allocation5], 1
    %2418 = vsyncpa %s2417, 1

</llo_original>
